<compile_context>
chip_gen: v5e
topology: v5e:2x2
jax: 0.10.0
libtpu: 0.0.40
codegen_flags: <defaults>
</compile_context>

<pallas_src>
import functools

import jax
import jax.numpy as jnp
from jax.experimental import pallas as pl
from jax.experimental.pallas import tpu as pltpu

GROUPS = 32
REDUCTION = 16


# ----------------------------------------------------------------------------
# small helpers
# ----------------------------------------------------------------------------
def _ceil_to(x, m):
    return ((x + m - 1) // m) * m


def _choose_tile(dim, max_tile, mult):
    """Largest tile <= max_tile (rounded to `mult`) that covers dim with minimal padding."""
    num = -(-dim // max_tile)
    return _ceil_to(-(-dim // num), mult)


def _pad_axis(a, axis, mult):
    sz = a.shape[axis]
    pad = (-sz) % mult
    if pad == 0:
        return a
    widths = [(0, 0)] * a.ndim
    widths[axis] = (0, pad)
    return jnp.pad(a, widths)


# ----------------------------------------------------------------------------
# Pallas kernels
# ----------------------------------------------------------------------------
def _matmul_bn_kernel(x_ref, w_ref, scale_ref, shift_ref, o_ref, acc_ref, *, relu):
    # x: (TM, TK) bf16; w: (TK, TN) bf16; scale/shift: (1, TN) f32
    # Accumulate over the K grid axis, apply BN (+ ReLU) in the epilogue.
    k = pl.program_id(2)

    @pl.when(k == 0)
    def _():
        acc_ref[...] = jnp.zeros_like(acc_ref)

    acc_ref[...] += jnp.dot(x_ref[...], w_ref[...],
                            preferred_element_type=jnp.float32)

    @pl.when(k == pl.num_programs(2) - 1)
    def _():
        y = acc_ref[...] * scale_ref[...] + shift_ref[...]
        if relu:
            y = jnp.maximum(y, 0.0)
        o_ref[...] = y.astype(o_ref.dtype)


def _mean_kernel(x_ref, o_ref, *, inv_hw):
    # x: (1, THW, C); o: (1, 1, C) f32 accumulator across the HW grid axis.
    t = pl.program_id(1)

    @pl.when(t == 0)
    def _():
        o_ref[...] = jnp.zeros_like(o_ref)

    o_ref[...] += jnp.sum(x_ref[...].astype(jnp.float32), axis=1, keepdims=True)

    @pl.when(t == pl.num_programs(1) - 1)
    def _():
        o_ref[...] = o_ref[...] * inv_hw


def _se_fc_kernel(s_ref, w1_ref, b1_ref, w2_ref, b2_ref, g_ref):
    # Squeeze-Excite gate: fc1 + relu, fc2 + sigmoid.  Tiny (N, C) problem.
    z = jnp.dot(s_ref[...], w1_ref[...],
                preferred_element_type=jnp.float32) + b1_ref[...]
    z = jnp.maximum(z, 0.0)
    g = jnp.dot(z, w2_ref[...],
                preferred_element_type=jnp.float32) + b2_ref[...]
    g_ref[...] = jax.nn.sigmoid(g)


def _scale_add_relu_kernel(y_ref, r_ref, g_ref, o_ref):
    # out = relu(y * gate + residual), fused (SE rescale + residual + ReLU).
    y = y_ref[0].astype(jnp.float32) * g_ref[0]
    y = y + r_ref[0].astype(jnp.float32)
    o_ref[0] = jnp.maximum(y, 0.0).astype(o_ref.dtype)


def _max_kernel(p_ref, o_ref):
    # p: (9, TM, C) -> max over the 9 pooling taps.
    o_ref[...] = jnp.max(p_ref[...], axis=0)


def _linear_kernel(s_ref, w_ref, b_ref, o_ref):
    o_ref[...] = jnp.dot(s_ref[...], w_ref[...],
                         preferred_element_type=jnp.float32) + b_ref[...]


# ----------------------------------------------------------------------------
# jitted Pallas wrappers (jit cache => one Mosaic compile per distinct shape)
# ----------------------------------------------------------------------------
@functools.partial(jax.jit, static_argnames=("relu",))
def _matmul_bn(x, w, scale, shift, *, relu):
    # x: (M, K) bf16; w: (K, N) bf16; scale/shift: (1, N) f32 -> (M, N) bf16
    M, K = x.shape
    N = w.shape[1]
    tm = _choose_tile(M, 512, 8)
    tn = _choose_tile(N, 256, 128)
    tk = _choose_tile(K, 512, 128)

    xp = _pad_axis(_pad_axis(x, 0, tm), 1, tk)
    wp = _pad_axis(_pad_axis(w, 0, tk), 1, tn)
    sp = _pad_axis(scale, 1, tn)
    bp = _pad_axis(shift, 1, tn)
    Mp, Kp = xp.shape
    Np = wp.shape[1]

    out = pl.pallas_call(
        functools.partial(_matmul_bn_kernel, relu=relu),
        out_shape=jax.ShapeDtypeStruct((Mp, Np), jnp.bfloat16),
        grid=(Mp // tm, Np // tn, Kp // tk),
        in_specs=[
            pl.BlockSpec((tm, tk), lambda i, j, k: (i, k)),
            pl.BlockSpec((tk, tn), lambda i, j, k: (k, j)),
            pl.BlockSpec((1, tn), lambda i, j, k: (0, j)),
            pl.BlockSpec((1, tn), lambda i, j, k: (0, j)),
        ],
        out_specs=pl.BlockSpec((tm, tn), lambda i, j, k: (i, j)),
        scratch_shapes=[pltpu.VMEM((tm, tn), jnp.float32)],
        compiler_params=pltpu.CompilerParams(
            dimension_semantics=("parallel", "parallel", "arbitrary")),
    )(xp, wp, sp, bp)
    return out[:M, :N]


@jax.jit
def _global_mean(x3):
    # (N, HW, C) -> (N, 1, C) f32 channel means (tiled reduction over HW).
    Nb, HW, C = x3.shape
    thw = _choose_tile(HW, 256, 8)
    xp = _pad_axis(x3, 1, thw)
    HWp = xp.shape[1]
    return pl.pallas_call(
        functools.partial(_mean_kernel, inv_hw=1.0 / HW),
        out_shape=jax.ShapeDtypeStruct((Nb, 1, C), jnp.float32),
        grid=(Nb, HWp // thw),
        in_specs=[pl.BlockSpec((1, thw, C), lambda n, t: (n, t, 0))],
        out_specs=pl.BlockSpec((1, 1, C), lambda n, t: (n, 0, 0)),
        compiler_params=pltpu.CompilerParams(
            dimension_semantics=("parallel", "arbitrary")),
    )(xp)


@jax.jit
def _se_fc(s, w1, b1, w2, b2):
    Nb, C = s.shape
    return pl.pallas_call(
        _se_fc_kernel,
        out_shape=jax.ShapeDtypeStruct((Nb, C), jnp.float32),
    )(s, w1, b1, w2, b2)


@jax.jit
def _se_scale_add_relu(y3, res3, gates):
    # relu(y3 * gates + res3), tiled over (batch, HW).
    Nb, HW, C = y3.shape
    thw = _choose_tile(HW, 256, 8)
    yp = _pad_axis(y3, 1, thw)
    rp = _pad_axis(res3, 1, thw)
    g3 = gates.reshape(Nb, 1, C)
    HWp = yp.shape[1]
    out = pl.pallas_call(
        _scale_add_relu_kernel,
        out_shape=jax.ShapeDtypeStruct((Nb, HWp, C), jnp.bfloat16),
        grid=(Nb, HWp // thw),
        in_specs=[
            pl.BlockSpec((1, thw, C), lambda n, t: (n, t, 0)),
            pl.BlockSpec((1, thw, C), lambda n, t: (n, t, 0)),
            pl.BlockSpec((1, 1, C), lambda n, t: (n, 0, 0)),
        ],
        out_specs=pl.BlockSpec((1, thw, C), lambda n, t: (n, t, 0)),
        compiler_params=pltpu.CompilerParams(
            dimension_semantics=("parallel", "parallel")),
    )(yp, rp, g3)
    return out[:, :HW, :]


@jax.jit
def _max_reduce(p3):
    # (9, M, C) -> (M, C), tiled over M.
    KK, M, C = p3.shape
    tm = _choose_tile(M, 512, 8)
    pp = _pad_axis(p3, 1, tm)
    Mp = pp.shape[1]
    out = pl.pallas_call(
        _max_kernel,
        out_shape=jax.ShapeDtypeStruct((Mp, C), p3.dtype),
        grid=(Mp // tm,),
        in_specs=[pl.BlockSpec((KK, tm, C), lambda i: (0, i, 0))],
        out_specs=pl.BlockSpec((tm, C), lambda i: (i, 0)),
        compiler_params=pltpu.CompilerParams(
            dimension_semantics=("parallel",)),
    )(pp)
    return out[:M]


@jax.jit
def _linear(s, w, b):
    Nb = s.shape[0]
    return pl.pallas_call(
        _linear_kernel,
        out_shape=jax.ShapeDtypeStruct((Nb, w.shape[1]), jnp.float32),
    )(s, w, b)


# ----------------------------------------------------------------------------
# Plain-JAX glue: im2col, layout reshapes
# ----------------------------------------------------------------------------
def _im2col(x, kh, kw, stride, padding):
    # x: (N, H, W, C) -> patches (N, Ho, Wo, kh*kw, C)
    N, H, W, C = x.shape
    xp = jnp.pad(x, ((0, 0), (padding, padding), (padding, padding), (0, 0)))
    Hp, Wp = H + 2 * padding, W + 2 * padding
    Ho = (Hp - kh) // stride + 1
    Wo = (Wp - kw) // stride + 1
    cols = []
    for i in range(kh):
        for j in range(kw):
            cols.append(xp[:, i:i + stride * (Ho - 1) + 1:stride,
                           j:j + stride * (Wo - 1) + 1:stride, :])
    patches = jnp.stack(cols, axis=3)                      # (N, Ho, Wo, KK, C)
    return patches, Ho, Wo


def conv1x1(x, w, scale, shift, *, relu, stride=1):
    # x: (N, H, W, Cin) bf16; w: (Cin, Cout) bf16. 1x1 conv == matmul.
    if stride > 1:
        x = x[:, ::stride, ::stride, :]
    Nb, H, W, Cin = x.shape
    out = _matmul_bn(x.reshape(Nb * H * W, Cin), w, scale, shift, relu=relu)
    return out.reshape(Nb, H, W, w.shape[1])


def conv_im2col(x, w_dense, kh, kw, stride, padding, scale, shift, *, relu):
    # kxk conv as im2col + dense matmul.  For the grouped 3x3 conv, w_dense is
    # the block-diagonal dense weight (K = kh*kw*width, N = width).
    Nb = x.shape[0]
    patches, Ho, Wo = _im2col(x, kh, kw, stride, padding)
    p = patches.reshape(Nb * Ho * Wo, w_dense.shape[0])
    out = _matmul_bn(p, w_dense, scale, shift, relu=relu)
    return out.reshape(Nb, Ho, Wo, w_dense.shape[1])


def maxpool_3x3_s2_ceil(x):
    # nn.MaxPool2d(3, stride=2, ceil_mode=True), padding=0
    Nb, H, W, C = x.shape
    Ho = -(-(H - 3) // 2) + 1
    Wo = -(-(W - 3) // 2) + 1
    Hn = (Ho - 1) * 2 + 3
    Wn = (Wo - 1) * 2 + 3
    xp = jnp.pad(x, ((0, 0), (0, Hn - H), (0, Wn - W), (0, 0)),
                 constant_values=-3e38)
    cols = []
    for i in range(3):
        for j in range(3):
            cols.append(xp[:, i:i + 2 * (Ho - 1) + 1:2,
                           j:j + 2 * (Wo - 1) + 1:2, :])
    stacked = jnp.stack(cols, axis=0).reshape(9, Nb * Ho * Wo, C)
    out = _max_reduce(stacked)
    return out.reshape(Nb, Ho, Wo, C)


# ----------------------------------------------------------------------------
# Deterministic parameter construction (synthetic weights)
# ----------------------------------------------------------------------------
class _KeyGen:
    def __init__(self, seed):
        self._key = jax.random.PRNGKey(seed)

    def __call__(self):
        self._key, k = jax.random.split(self._key)
        return k


def conv_weight(kg, kh, kw, cin, cout, groups=1):
    cig, cog = cin // groups, cout // groups
    fan_in = kh * kw * cig
    std = (2.0 / fan_in) ** 0.5
    return (jax.random.normal(kg(), (groups, kh, kw, cig, cog),
                              jnp.float32) * std)


def bn_params(kg, c, eps=1e-5):
    gamma = 1.0 + 0.1 * jax.random.normal(kg(), (c,), jnp.float32)
    beta = 0.1 * jax.random.normal(kg(), (c,), jnp.float32)
    mean = 0.1 * jax.random.normal(kg(), (c,), jnp.float32)
    var = 1.0 + 0.1 * jax.random.uniform(kg(), (c,), jnp.float32)
    scale = gamma * jax.lax.rsqrt(var + eps)
    shift = beta - mean * scale
    return scale.reshape(1, c), shift.reshape(1, c)


def _blockdiag_conv_weight(w):
    # w: (G, kh, kw, cig, cog) grouped conv weight -> dense block-diagonal
    # matmul weight of shape (kh*kw*G*cig, G*cog).  Trades ~G x redundant MACs
    # for lane-dense, full-width MXU tiles (reviewer option (b)).
    G, kh, kw, cig, cog = w.shape
    wt = jnp.transpose(w, (1, 2, 0, 3, 4))                 # (kh, kw, G, cig, cog)
    eye = jnp.eye(G, dtype=w.dtype)
    wd = wt[:, :, :, :, None, :] * eye[None, None, :, None, :, None]
    return wd.reshape(kh * kw * G * cig, G * cog)


def build_params(seed=0):
    kg = _KeyGen(seed)
    p = {}
    # layer0 (stem): conv7x7/2 -> bn -> relu -> maxpool3x3/2(ceil)
    w = conv_weight(kg, 7, 7, 3, 64)                       # (1, 7, 7, 3, 64)
    p["stem_w"] = w.reshape(7 * 7 * 3, 64).astype(jnp.bfloat16)
    p["stem_bn"] = bn_params(kg, 64)

    blocks = []
    inplanes = 64
    for planes, nblk, stride in [(64, 3, 1), (128, 4, 2), (256, 6, 2), (512, 3, 2)]:
        width = (planes * 4 // 64) * GROUPS        # ResNeXt 32x4d bottleneck width
        outp = planes * 4
        for b in range(nblk):
            s = stride if b == 0 else 1
            bp = {"stride": s}
            bp["w1"] = conv_weight(kg, 1, 1, inplanes, width).reshape(
                inplanes, width).astype(jnp.bfloat16)
            bp["bn1"] = bn_params(kg, width)
            w2 = conv_weight(kg, 3, 3, width, width, groups=GROUPS)
            bp["w2"] = _blockdiag_conv_weight(w2).astype(jnp.bfloat16)
            bp["bn2"] = bn_params(kg, width)
            bp["w3"] = conv_weight(kg, 1, 1, width, outp).reshape(
                width, outp).astype(jnp.bfloat16)
            bp["bn3"] = bn_params(kg, outp)
            cr = outp // REDUCTION
            bp["se_w1"] = jax.random.normal(kg(), (outp, cr), jnp.float32) * (2.0 / outp) ** 0.5
            bp["se_b1"] = 0.01 * jax.random.normal(kg(), (1, cr), jnp.float32)
            bp["se_w2"] = jax.random.normal(kg(), (cr, outp), jnp.float32) * (2.0 / cr) ** 0.5
            bp["se_b2"] = 0.01 * jax.random.normal(kg(), (1, outp), jnp.float32)
            if s != 1 or inplanes != outp:
                bp["wd"] = conv_weight(kg, 1, 1, inplanes, outp).reshape(
                    inplanes, outp).astype(jnp.bfloat16)
                bp["bnd"] = bn_params(kg, outp)
            blocks.append(bp)
            inplanes = outp
    p["blocks"] = blocks

    # head: last_linear(2048 -> 1)
    p["head_w"] = jax.random.normal(kg(), (2048, 1), jnp.float32) * (1.0 / 2048.0) ** 0.5
    p["head_b"] = 0.01 * jax.random.normal(kg(), (1, 1), jnp.float32)
    return p


# ----------------------------------------------------------------------------
# Forward pass
# ----------------------------------------------------------------------------
def bottleneck(x, bp):
    s = bp["stride"]
    # conv1(1x1)+bn1+relu, conv2(grouped 3x3, block-diag dense)+bn2+relu,
    # conv3(1x1)+bn3 -- BN/ReLU fused into the matmul epilogues.
    out = conv1x1(x, bp["w1"], *bp["bn1"], relu=True)
    out = conv_im2col(out, bp["w2"], 3, 3, s, 1, *bp["bn2"], relu=True)
    out = conv1x1(out, bp["w3"], *bp["bn3"], relu=False)
    if "wd" in bp:
        residual = conv1x1(x, bp["wd"], *bp["bnd"], relu=False, stride=s)
    else:
        residual = x
    Nb, Ho, Wo, C = out.shape
    out3 = out.reshape(Nb, Ho * Wo, C)
    res3 = residual.reshape(Nb, Ho * Wo, C)
    # SE: tiled global mean -> tiny FC gates -> fused scale+residual+relu.
    means = _global_mean(out3)[:, 0, :]                                # (N, C) f32
    gates = _se_fc(means, bp["se_w1"], bp["se_b1"], bp["se_w2"], bp["se_b2"])
    y = _se_scale_add_relu(out3, res3, gates)
    return y.reshape(Nb, Ho, Wo, C)


def seresnext50_forward(params, x_nchw):
    # PyTorch input is NCHW; convert to NHWC (channels -> lanes), cast to bf16.
    x = jnp.transpose(x_nchw, (0, 2, 3, 1)).astype(jnp.bfloat16)
    x = conv_im2col(x, params["stem_w"], 7, 7, 2, 3, *params["stem_bn"], relu=True)
    x = maxpool_3x3_s2_ceil(x)
    for bp in params["blocks"]:
        x = bottleneck(x, bp)
    Nb, H, W, C = x.shape
    # AdaptiveAvgPool2d(1) (tiled mean kernel) + Linear(2048, 1).
    pooled = _global_mean(x.reshape(Nb, H * W, C))[:, 0, :]            # (N, 2048) f32
    return _linear(pooled, params["head_w"], params["head_b"])


# ----------------------------------------------------------------------------
if __name__ == "__main__":
    params = build_params(seed=0)
    x = jax.random.normal(jax.random.PRNGKey(0), (2, 3, 32, 32), jnp.float32)
    out = seresnext50_forward(params, x)
    out = jax.block_until_ready(out)
    assert out.shape == (2, 1), out.shape
    print("KERNEL_OK")
</pallas_src>

<mosaic_0001>
module attributes {stable_mosaic.version = 11 : i64} {
  func.func @_matmul_bn_kernel(%arg0: i32, %arg1: i32, %arg2: i32, %arg3: memref<512x256xbf16, #tpu.memory_space<vmem>>, %arg4: memref<256x128xbf16, #tpu.memory_space<vmem>>, %arg5: memref<1x128xf32, #tpu.memory_space<vmem>>, %arg6: memref<1x128xf32, #tpu.memory_space<vmem>>, %arg7: memref<512x128xbf16, #tpu.memory_space<vmem>>, %arg8: memref<512x128xf32, #tpu.memory_space<vmem>>) attributes {dimension_semantics = [#tpu.dimension_semantics<parallel>, #tpu.dimension_semantics<parallel>, #tpu.dimension_semantics<arbitrary>], iteration_bounds = array<i64: 1, 1, 1>, scalar_prefetch = 0 : i64, scratch_operands = 1 : i64, tpu.core_type = #tpu.core_type<tc>, window_params = [{transform_indices = @transform_0, window_bounds = array<i64: 512, 256>}, {transform_indices = @transform_1, window_bounds = array<i64: 256, 128>}, {transform_indices = @transform_2, window_bounds = array<i64: 1, 128>}, {transform_indices = @transform_3, window_bounds = array<i64: 1, 128>}, {transform_indices = @transform_4, window_bounds = array<i64: 512, 128>}]} {
    %c0_i32 = arith.constant 0 : i32
    %0 = arith.cmpi eq, %arg2, %c0_i32 : i32
    %1 = arith.extui %0 : i1 to i32
    %c0_i32_0 = arith.constant 0 : i32
    %2 = arith.cmpi ne, %1, %c0_i32_0 : i32
    scf.if %2 {
      %cst_10 = arith.constant 0.000000e+00 : f32
      %12 = vector.broadcast %cst_10 : f32 to vector<512x128xf32>
      %c0_11 = arith.constant 0 : index
      %c0_12 = arith.constant 0 : index
      %13 = vector.load %arg8[%c0_11, %c0_12] : memref<512x128xf32, #tpu.memory_space<vmem>>, vector<512x128xf32>
      tpu.vector_store %arg8[%c0_11, %c0_12], %12 {strides = array<i32>} : memref<512x128xf32, #tpu.memory_space<vmem>>, vector<512x128xf32>,
    } else {
    }
    %c0 = arith.constant 0 : index
    %c0_1 = arith.constant 0 : index
    %3 = vector.load %arg8[%c0, %c0_1] : memref<512x128xf32, #tpu.memory_space<vmem>>, vector<512x128xf32>
    %c0_2 = arith.constant 0 : index
    %c0_3 = arith.constant 0 : index
    %4 = vector.load %arg3[%c0_2, %c0_3] : memref<512x256xbf16, #tpu.memory_space<vmem>>, vector<512x256xbf16>
    %c0_4 = arith.constant 0 : index
    %c0_5 = arith.constant 0 : index
    %5 = vector.load %arg4[%c0_4, %c0_5] : memref<256x128xbf16, #tpu.memory_space<vmem>>, vector<256x128xbf16>
    %cst = arith.constant dense<0.000000e+00> : vector<512x128xf32>
    %6 = tpu.matmul %4, %5, %cst {dimension_numbers = #tpu.dot_dimension_numbers<[1], [0], [0], [1], [0, 0, 1, 1], [], []>} : vector<512x256xbf16>, vector<256x128xbf16>, vector<512x128xf32> -> vector<512x128xf32>
    %7 = arith.addf %3, %6 : vector<512x128xf32>
    %c0_6 = arith.constant 0 : index
    %c0_7 = arith.constant 0 : index
    %8 = vector.load %arg8[%c0_6, %c0_7] : memref<512x128xf32, #tpu.memory_space<vmem>>, vector<512x128xf32>
    tpu.vector_store %arg8[%c0_6, %c0_7], %7 {strides = array<i32>} : memref<512x128xf32, #tpu.memory_space<vmem>>, vector<512x128xf32>,
    %c0_i32_8 = arith.constant 0 : i32
    %9 = arith.cmpi eq, %arg2, %c0_i32_8 : i32
    %10 = arith.extui %9 : i1 to i32
    %c0_i32_9 = arith.constant 0 : i32
    %11 = arith.cmpi ne, %10, %c0_i32_9 : i32
    scf.if %11 {
      %c0_10 = arith.constant 0 : index
      %c0_11 = arith.constant 0 : index
      %12 = vector.load %arg8[%c0_10, %c0_11] : memref<512x128xf32, #tpu.memory_space<vmem>>, vector<512x128xf32>
      %c0_12 = arith.constant 0 : index
      %c0_13 = arith.constant 0 : index
      %13 = vector.load %arg5[%c0_12, %c0_13] : memref<1x128xf32, #tpu.memory_space<vmem>>, vector<1x128xf32>
      %14 = vector.broadcast %13 : vector<1x128xf32> to vector<512x128xf32>
      %15 = arith.mulf %12, %14 : vector<512x128xf32>
      %c0_14 = arith.constant 0 : index
      %c0_15 = arith.constant 0 : index
      %16 = vector.load %arg6[%c0_14, %c0_15] : memref<1x128xf32, #tpu.memory_space<vmem>>, vector<1x128xf32>
      %17 = vector.broadcast %16 : vector<1x128xf32> to vector<512x128xf32>
      %18 = arith.addf %15, %17 : vector<512x128xf32>
      %cst_16 = arith.constant 0.000000e+00 : f32
      %19 = vector.broadcast %cst_16 : f32 to vector<512x128xf32>
      %20 = arith.maximumf %18, %19 : vector<512x128xf32>
      %21 = arith.truncf %20 : vector<512x128xf32> to vector<512x128xbf16>
      %c0_17 = arith.constant 0 : index
      %c0_18 = arith.constant 0 : index
      %22 = vector.load %arg7[%c0_17, %c0_18] : memref<512x128xbf16, #tpu.memory_space<vmem>>, vector<512x128xbf16>
      tpu.vector_store %arg7[%c0_17, %c0_18], %21 {strides = array<i32>} : memref<512x128xbf16, #tpu.memory_space<vmem>>, vector<512x128xbf16>,
    } else {
    }
    return
  }
  func.func @transform_0(%arg0: i32, %arg1: i32, %arg2: i32) -> (i32, i32) {
    %c0_i32 = arith.constant 0 : i32
    return %arg0, %arg2 : i32, i32
  }
  func.func @transform_1(%arg0: i32, %arg1: i32, %arg2: i32) -> (i32, i32) {
    %c0_i32 = arith.constant 0 : i32
    return %arg2, %arg1 : i32, i32
  }
  func.func @transform_2(%arg0: i32, %arg1: i32, %arg2: i32) -> (i32, i32) {
    %c0_i32 = arith.constant 0 : i32
    %c0_i32_0 = arith.constant 0 : i32
    return %c0_i32, %arg1 : i32, i32
  }
  func.func @transform_3(%arg0: i32, %arg1: i32, %arg2: i32) -> (i32, i32) {
    %c0_i32 = arith.constant 0 : i32
    %c0_i32_0 = arith.constant 0 : i32
    return %c0_i32, %arg1 : i32, i32
  }
  func.func @transform_4(%arg0: i32, %arg1: i32, %arg2: i32) -> (i32, i32) {
    %c0_i32 = arith.constant 0 : i32
    return %arg0, %arg1 : i32, i32
  }
}

</mosaic_0001>

<llo_original>
// kernel: _matmul_bn.1
$region0: #{_matmul_bn.1}
  #allocation0 [shape = 'u32[]', space=smem, size = 0x4, offset = 0x4, fixed_abs, tag = 'smem constant byte address 0x4 - core index']
  #allocation1 [shape = 'u32[72,128]{1,0:T(1,128)}', space=vmem, size = 0x9000, scoped, tag = 'internal scratch']
  #allocation2 [shape = 'f32[512,128]{1,0:T(8,128)}', space=vmem, size = 0x40000, scoped, tag = 'scratch operand']
  %s0 = inlined_call_operand.vmem [shape: bf16[512,256], index: 0, kind: input, shape index: {}]
  %s1 = inlined_call_operand.vmem [shape: bf16[256,128], index: 1, kind: input, shape index: {}]
  %s2 = inlined_call_operand.vmem [shape: f32[1,128], index: 2, kind: input, shape index: {}]
  %s3 = inlined_call_operand.vmem [shape: f32[1,128], index: 3, kind: input, shape index: {}]
  %s4 = inlined_call_operand.vmem [shape: bf16[512,128], index: 4, kind: output, shape index: {}]
  %s5 = sld [smem:[#allocation0]]
  $region34: #{_matmul_bn.1} parent=0
    _
  %s7 = ssub.s32 1, %s5
  %s8 = scalar_select 0, %s7, %s5
  // Predicated region
  $region2: #{_matmul_bn.1} parent=0 // pred_check
    _
  $region3: #{_matmul_bn.1} parent=0 // pred_check_branch
    %10 = sbr.rel (0) target = $region5
  $region4: #{_matmul_bn.1} parent=0 // pred_region
    _
  $region5: #{_matmul_bn.1} parent=0 // pred_fallthru
    _
  // Predicated region
  $region6: #{_matmul_bn.1} parent=0 // pred_check
    _
  $region7: #{_matmul_bn.1} parent=0 // pred_check_branch
    %12 = sbr.rel (0) target = $region9
  $region8: #{_matmul_bn.1} parent=0 // pred_region
    _
  $region9: #{_matmul_bn.1} parent=0 // pred_fallthru
    _
  // Predicated region
  $region10: #{_matmul_bn.1} parent=0 // pred_check
    _
  $region11: #{_matmul_bn.1} parent=0 // pred_check_branch
    %14 = sbr.rel (0) target = $region13
  $region12: #{_matmul_bn.1} parent=0 // pred_region
    _
  $region13: #{_matmul_bn.1} parent=0 // pred_fallthru
    _
  // Predicated region
  $region14: #{_matmul_bn.1} parent=0 // pred_check
    _
  $region15: #{_matmul_bn.1} parent=0 // pred_check_branch
    %16 = sbr.rel (0) target = $region17
  $region16: #{_matmul_bn.1} parent=0 // pred_region
    _
  $region17: #{_matmul_bn.1} parent=0 // pred_fallthru
    _
  %p17 = scmp.eq.s32.totalorder 0, 0
  // Predicated region
  $region18: #{_matmul_bn.1} parent=0 // pred_check
    %p18 = pneg %p17
  $region19: #{_matmul_bn.1} parent=0 // pred_check_branch
    %20 = sbr.rel (%p18) target = $region21
  $region20: #{_matmul_bn.1} parent=0 // pred_region
    %21 = vst [vmem:[#allocation2] sm:$0xff] 0.0
    %22 = vst [vmem:[#allocation2 + $0x8] sm:$0xff] 0.0
    %23 = vst [vmem:[#allocation2 + $0x10] sm:$0xff] 0.0
    %24 = vst [vmem:[#allocation2 + $0x18] sm:$0xff] 0.0
    %25 = vst [vmem:[#allocation2 + $0x20] sm:$0xff] 0.0
    %26 = vst [vmem:[#allocation2 + $0x28] sm:$0xff] 0.0
    %27 = vst [vmem:[#allocation2 + $0x30] sm:$0xff] 0.0
    %28 = vst [vmem:[#allocation2 + $0x38] sm:$0xff] 0.0
    %29 = vst [vmem:[#allocation2 + $0x40] sm:$0xff] 0.0
    %30 = vst [vmem:[#allocation2 + $0x48] sm:$0xff] 0.0
    %31 = vst [vmem:[#allocation2 + $0x50] sm:$0xff] 0.0
    %32 = vst [vmem:[#allocation2 + $0x58] sm:$0xff] 0.0
    %33 = vst [vmem:[#allocation2 + $0x60] sm:$0xff] 0.0
    %34 = vst [vmem:[#allocation2 + $0x68] sm:$0xff] 0.0
    %35 = vst [vmem:[#allocation2 + $0x70] sm:$0xff] 0.0
    %36 = vst [vmem:[#allocation2 + $0x78] sm:$0xff] 0.0
    %37 = vst [vmem:[#allocation2 + $0x80] sm:$0xff] 0.0
    %38 = vst [vmem:[#allocation2 + $0x88] sm:$0xff] 0.0
    %39 = vst [vmem:[#allocation2 + $0x90] sm:$0xff] 0.0
    %40 = vst [vmem:[#allocation2 + $0x98] sm:$0xff] 0.0
    %41 = vst [vmem:[#allocation2 + $0xa0] sm:$0xff] 0.0
    %42 = vst [vmem:[#allocation2 + $0xa8] sm:$0xff] 0.0
    %43 = vst [vmem:[#allocation2 + $0xb0] sm:$0xff] 0.0
    %44 = vst [vmem:[#allocation2 + $0xb8] sm:$0xff] 0.0
    %45 = vst [vmem:[#allocation2 + $0xc0] sm:$0xff] 0.0
    %46 = vst [vmem:[#allocation2 + $0xc8] sm:$0xff] 0.0
    %47 = vst [vmem:[#allocation2 + $0xd0] sm:$0xff] 0.0
    %48 = vst [vmem:[#allocation2 + $0xd8] sm:$0xff] 0.0
    %49 = vst [vmem:[#allocation2 + $0xe0] sm:$0xff] 0.0
    %50 = vst [vmem:[#allocation2 + $0xe8] sm:$0xff] 0.0
    %51 = vst [vmem:[#allocation2 + $0xf0] sm:$0xff] 0.0
    %52 = vst [vmem:[#allocation2 + $0xf8] sm:$0xff] 0.0
    %53 = vst [vmem:[#allocation2 + $0x100] sm:$0xff] 0.0
    %54 = vst [vmem:[#allocation2 + $0x108] sm:$0xff] 0.0
    %55 = vst [vmem:[#allocation2 + $0x110] sm:$0xff] 0.0
    %56 = vst [vmem:[#allocation2 + $0x118] sm:$0xff] 0.0
    %57 = vst [vmem:[#allocation2 + $0x120] sm:$0xff] 0.0
    %58 = vst [vmem:[#allocation2 + $0x128] sm:$0xff] 0.0
    %59 = vst [vmem:[#allocation2 + $0x130] sm:$0xff] 0.0
    %60 = vst [vmem:[#allocation2 + $0x138] sm:$0xff] 0.0
    %61 = vst [vmem:[#allocation2 + $0x140] sm:$0xff] 0.0
    %62 = vst [vmem:[#allocation2 + $0x148] sm:$0xff] 0.0
    %63 = vst [vmem:[#allocation2 + $0x150] sm:$0xff] 0.0
    %64 = vst [vmem:[#allocation2 + $0x158] sm:$0xff] 0.0
    %65 = vst [vmem:[#allocation2 + $0x160] sm:$0xff] 0.0
    %66 = vst [vmem:[#allocation2 + $0x168] sm:$0xff] 0.0
    %67 = vst [vmem:[#allocation2 + $0x170] sm:$0xff] 0.0
    %68 = vst [vmem:[#allocation2 + $0x178] sm:$0xff] 0.0
    %69 = vst [vmem:[#allocation2 + $0x180] sm:$0xff] 0.0
    %70 = vst [vmem:[#allocation2 + $0x188] sm:$0xff] 0.0
    %71 = vst [vmem:[#allocation2 + $0x190] sm:$0xff] 0.0
    %72 = vst [vmem:[#allocation2 + $0x198] sm:$0xff] 0.0
    %73 = vst [vmem:[#allocation2 + $0x1a0] sm:$0xff] 0.0
    %74 = vst [vmem:[#allocation2 + $0x1a8] sm:$0xff] 0.0
    %75 = vst [vmem:[#allocation2 + $0x1b0] sm:$0xff] 0.0
    %76 = vst [vmem:[#allocation2 + $0x1b8] sm:$0xff] 0.0
    %77 = vst [vmem:[#allocation2 + $0x1c0] sm:$0xff] 0.0
    %78 = vst [vmem:[#allocation2 + $0x1c8] sm:$0xff] 0.0
    %79 = vst [vmem:[#allocation2 + $0x1d0] sm:$0xff] 0.0
    %80 = vst [vmem:[#allocation2 + $0x1d8] sm:$0xff] 0.0
    %81 = vst [vmem:[#allocation2 + $0x1e0] sm:$0xff] 0.0
    %82 = vst [vmem:[#allocation2 + $0x1e8] sm:$0xff] 0.0
    %83 = vst [vmem:[#allocation2 + $0x1f0] sm:$0xff] 0.0
    %84 = vst [vmem:[#allocation2 + $0x1f8] sm:$0xff] 0.0
  $region21: #{_matmul_bn.1} parent=0 // pred_fallthru
    _
  %v85 = vld [vmem:[#allocation2] sm:$0xff]
  %v86 = vld [vmem:[#allocation2 + $0x8] sm:$0xff]
  %v87 = vld [vmem:[#allocation2 + $0x10] sm:$0xff]
  %v88 = vld [vmem:[#allocation2 + $0x18] sm:$0xff]
  %v89 = vld [vmem:[#allocation2 + $0x20] sm:$0xff]
  %v90 = vld [vmem:[#allocation2 + $0x28] sm:$0xff]
  %v91 = vld [vmem:[#allocation2 + $0x30] sm:$0xff]
  %v92 = vld [vmem:[#allocation2 + $0x38] sm:$0xff]
  %v93 = vld [vmem:[#allocation2 + $0x40] sm:$0xff]
  %v94 = vld [vmem:[#allocation2 + $0x48] sm:$0xff]
  %v95 = vld [vmem:[#allocation2 + $0x50] sm:$0xff]
  %v96 = vld [vmem:[#allocation2 + $0x58] sm:$0xff]
  %v97 = vld [vmem:[#allocation2 + $0x60] sm:$0xff]
  %v98 = vld [vmem:[#allocation2 + $0x68] sm:$0xff]
  %v99 = vld [vmem:[#allocation2 + $0x70] sm:$0xff]
  %v100 = vld [vmem:[#allocation2 + $0x78] sm:$0xff]
  %v101 = vld [vmem:[#allocation2 + $0x80] sm:$0xff]
  %v102 = vld [vmem:[#allocation2 + $0x88] sm:$0xff]
  %v103 = vld [vmem:[#allocation2 + $0x90] sm:$0xff]
  %v104 = vld [vmem:[#allocation2 + $0x98] sm:$0xff]
  %v105 = vld [vmem:[#allocation2 + $0xa0] sm:$0xff]
  %v106 = vld [vmem:[#allocation2 + $0xa8] sm:$0xff]
  %v107 = vld [vmem:[#allocation2 + $0xb0] sm:$0xff]
  %v108 = vld [vmem:[#allocation2 + $0xb8] sm:$0xff]
  %v109 = vld [vmem:[#allocation2 + $0xc0] sm:$0xff]
  %v110 = vld [vmem:[#allocation2 + $0xc8] sm:$0xff]
  %v111 = vld [vmem:[#allocation2 + $0xd0] sm:$0xff]
  %v112 = vld [vmem:[#allocation2 + $0xd8] sm:$0xff]
  %v113 = vld [vmem:[#allocation2 + $0xe0] sm:$0xff]
  %v114 = vld [vmem:[#allocation2 + $0xe8] sm:$0xff]
  %v115 = vld [vmem:[#allocation2 + $0xf0] sm:$0xff]
  %v116 = vld [vmem:[#allocation2 + $0xf8] sm:$0xff]
  %v117 = vld [vmem:[#allocation2 + $0x100] sm:$0xff]
  %v118 = vld [vmem:[#allocation2 + $0x108] sm:$0xff]
  %v119 = vld [vmem:[#allocation2 + $0x110] sm:$0xff]
  %v120 = vld [vmem:[#allocation2 + $0x118] sm:$0xff]
  %v121 = vld [vmem:[#allocation2 + $0x120] sm:$0xff]
  %v122 = vld [vmem:[#allocation2 + $0x128] sm:$0xff]
  %v123 = vld [vmem:[#allocation2 + $0x130] sm:$0xff]
  %v124 = vld [vmem:[#allocation2 + $0x138] sm:$0xff]
  %v125 = vld [vmem:[#allocation2 + $0x140] sm:$0xff]
  %v126 = vld [vmem:[#allocation2 + $0x148] sm:$0xff]
  %v127 = vld [vmem:[#allocation2 + $0x150] sm:$0xff]
  %v128 = vld [vmem:[#allocation2 + $0x158] sm:$0xff]
  %v129 = vld [vmem:[#allocation2 + $0x160] sm:$0xff]
  %v130 = vld [vmem:[#allocation2 + $0x168] sm:$0xff]
  %v131 = vld [vmem:[#allocation2 + $0x170] sm:$0xff]
  %v132 = vld [vmem:[#allocation2 + $0x178] sm:$0xff]
  %v133 = vld [vmem:[#allocation2 + $0x180] sm:$0xff]
  %v134 = vld [vmem:[#allocation2 + $0x188] sm:$0xff]
  %v135 = vld [vmem:[#allocation2 + $0x190] sm:$0xff]
  %v136 = vld [vmem:[#allocation2 + $0x198] sm:$0xff]
  %v137 = vld [vmem:[#allocation2 + $0x1a0] sm:$0xff]
  %v138 = vld [vmem:[#allocation2 + $0x1a8] sm:$0xff]
  %v139 = vld [vmem:[#allocation2 + $0x1b0] sm:$0xff]
  %v140 = vld [vmem:[#allocation2 + $0x1b8] sm:$0xff]
  %v141 = vld [vmem:[#allocation2 + $0x1c0] sm:$0xff]
  %v142 = vld [vmem:[#allocation2 + $0x1c8] sm:$0xff]
  %v143 = vld [vmem:[#allocation2 + $0x1d0] sm:$0xff]
  %v144 = vld [vmem:[#allocation2 + $0x1d8] sm:$0xff]
  %v145 = vld [vmem:[#allocation2 + $0x1e0] sm:$0xff]
  %v146 = vld [vmem:[#allocation2 + $0x1e8] sm:$0xff]
  %v147 = vld [vmem:[#allocation2 + $0x1f0] sm:$0xff]
  %v148 = vld [vmem:[#allocation2 + $0x1f8] sm:$0xff]
  %v149 = vld [vmem:[%s0] sm:$0xff]
  %v150 = vld [vmem:[%s0 + $0x8] sm:$0xff]
  %v151 = vld [vmem:[%s0 + $0x10] sm:$0xff]
  %v152 = vld [vmem:[%s0 + $0x18] sm:$0xff]
  %v153 = vld [vmem:[%s0 + $0x20] sm:$0xff]
  %v154 = vld [vmem:[%s0 + $0x28] sm:$0xff]
  %v155 = vld [vmem:[%s0 + $0x30] sm:$0xff]
  %v156 = vld [vmem:[%s0 + $0x38] sm:$0xff]
  %v157 = vld [vmem:[%s0 + $0x40] sm:$0xff]
  %v158 = vld [vmem:[%s0 + $0x48] sm:$0xff]
  %v159 = vld [vmem:[%s0 + $0x50] sm:$0xff]
  %v160 = vld [vmem:[%s0 + $0x58] sm:$0xff]
  %v161 = vld [vmem:[%s0 + $0x60] sm:$0xff]
  %v162 = vld [vmem:[%s0 + $0x68] sm:$0xff]
  %v163 = vld [vmem:[%s0 + $0x70] sm:$0xff]
  %v164 = vld [vmem:[%s0 + $0x78] sm:$0xff]
  %v165 = vld [vmem:[%s0 + $0x80] sm:$0xff]
  %v166 = vld [vmem:[%s0 + $0x88] sm:$0xff]
  %v167 = vld [vmem:[%s0 + $0x90] sm:$0xff]
  %v168 = vld [vmem:[%s0 + $0x98] sm:$0xff]
  %v169 = vld [vmem:[%s0 + $0xa0] sm:$0xff]
  %v170 = vld [vmem:[%s0 + $0xa8] sm:$0xff]
  %v171 = vld [vmem:[%s0 + $0xb0] sm:$0xff]
  %v172 = vld [vmem:[%s0 + $0xb8] sm:$0xff]
  %v173 = vld [vmem:[%s0 + $0xc0] sm:$0xff]
  %v174 = vld [vmem:[%s0 + $0xc8] sm:$0xff]
  %v175 = vld [vmem:[%s0 + $0xd0] sm:$0xff]
  %v176 = vld [vmem:[%s0 + $0xd8] sm:$0xff]
  %v177 = vld [vmem:[%s0 + $0xe0] sm:$0xff]
  %v178 = vld [vmem:[%s0 + $0xe8] sm:$0xff]
  %v179 = vld [vmem:[%s0 + $0xf0] sm:$0xff]
  %v180 = vld [vmem:[%s0 + $0xf8] sm:$0xff]
  %v181 = vld [vmem:[%s0 + $0x100] sm:$0xff]
  %v182 = vld [vmem:[%s0 + $0x108] sm:$0xff]
  %v183 = vld [vmem:[%s0 + $0x110] sm:$0xff]
  %v184 = vld [vmem:[%s0 + $0x118] sm:$0xff]
  %v185 = vld [vmem:[%s0 + $0x120] sm:$0xff]
  %v186 = vld [vmem:[%s0 + $0x128] sm:$0xff]
  %v187 = vld [vmem:[%s0 + $0x130] sm:$0xff]
  %v188 = vld [vmem:[%s0 + $0x138] sm:$0xff]
  %v189 = vld [vmem:[%s0 + $0x140] sm:$0xff]
  %v190 = vld [vmem:[%s0 + $0x148] sm:$0xff]
  %v191 = vld [vmem:[%s0 + $0x150] sm:$0xff]
  %v192 = vld [vmem:[%s0 + $0x158] sm:$0xff]
  %v193 = vld [vmem:[%s0 + $0x160] sm:$0xff]
  %v194 = vld [vmem:[%s0 + $0x168] sm:$0xff]
  %v195 = vld [vmem:[%s0 + $0x170] sm:$0xff]
  %v196 = vld [vmem:[%s0 + $0x178] sm:$0xff]
  %v197 = vld [vmem:[%s0 + $0x180] sm:$0xff]
  %v198 = vld [vmem:[%s0 + $0x188] sm:$0xff]
  %v199 = vld [vmem:[%s0 + $0x190] sm:$0xff]
  %v200 = vld [vmem:[%s0 + $0x198] sm:$0xff]
  %v201 = vld [vmem:[%s0 + $0x1a0] sm:$0xff]
  %v202 = vld [vmem:[%s0 + $0x1a8] sm:$0xff]
  %v203 = vld [vmem:[%s0 + $0x1b0] sm:$0xff]
  %v204 = vld [vmem:[%s0 + $0x1b8] sm:$0xff]
  %v205 = vld [vmem:[%s0 + $0x1c0] sm:$0xff]
  %v206 = vld [vmem:[%s0 + $0x1c8] sm:$0xff]
  %v207 = vld [vmem:[%s0 + $0x1d0] sm:$0xff]
  %v208 = vld [vmem:[%s0 + $0x1d8] sm:$0xff]
  %v209 = vld [vmem:[%s0 + $0x1e0] sm:$0xff]
  %v210 = vld [vmem:[%s0 + $0x1e8] sm:$0xff]
  %v211 = vld [vmem:[%s0 + $0x1f0] sm:$0xff]
  %v212 = vld [vmem:[%s0 + $0x1f8] sm:$0xff]
  %v213 = vld [vmem:[%s1] sm:$0xf]
  %v214 = vld [vmem:[%s1 + $0x4] sm:$0xf]
  %v215 = vld [vmem:[%s1 + $0x8] sm:$0xf]
  %v216 = vld [vmem:[%s1 + $0xc] sm:$0xf]
  %v217 = vld [vmem:[%s1 + $0x10] sm:$0xf]
  %v218 = vld [vmem:[%s1 + $0x14] sm:$0xf]
  %v219 = vld [vmem:[%s1 + $0x18] sm:$0xf]
  %v220 = vld [vmem:[%s1 + $0x1c] sm:$0xf]
  %v221 = vld [vmem:[%s1 + $0x20] sm:$0xf]
  %v222 = vld [vmem:[%s1 + $0x24] sm:$0xf]
  %v223 = vld [vmem:[%s1 + $0x28] sm:$0xf]
  %v224 = vld [vmem:[%s1 + $0x2c] sm:$0xf]
  %v225 = vld [vmem:[%s1 + $0x30] sm:$0xf]
  %v226 = vld [vmem:[%s1 + $0x34] sm:$0xf]
  %v227 = vld [vmem:[%s1 + $0x38] sm:$0xf]
  %v228 = vld [vmem:[%s1 + $0x3c] sm:$0xf]
  %v229 = vld [vmem:[%s1 + $0x40] sm:$0xf]
  %v230 = vld [vmem:[%s1 + $0x44] sm:$0xf]
  %v231 = vld [vmem:[%s1 + $0x48] sm:$0xf]
  %v232 = vld [vmem:[%s1 + $0x4c] sm:$0xf]
  %v233 = vld [vmem:[%s1 + $0x50] sm:$0xf]
  %v234 = vld [vmem:[%s1 + $0x54] sm:$0xf]
  %v235 = vld [vmem:[%s1 + $0x58] sm:$0xf]
  %v236 = vld [vmem:[%s1 + $0x5c] sm:$0xf]
  %v237 = vld [vmem:[%s1 + $0x60] sm:$0xf]
  %v238 = vld [vmem:[%s1 + $0x64] sm:$0xf]
  %v239 = vld [vmem:[%s1 + $0x68] sm:$0xf]
  %v240 = vld [vmem:[%s1 + $0x6c] sm:$0xf]
  %v241 = vld [vmem:[%s1 + $0x70] sm:$0xf]
  %v242 = vld [vmem:[%s1 + $0x74] sm:$0xf]
  %v243 = vld [vmem:[%s1 + $0x78] sm:$0xf]
  %v244 = vld [vmem:[%s1 + $0x7c] sm:$0xf]
  %v309 = vunpack.c.l.b16 %v149
  %v310 = vunpack.c.h.b16 %v149
  %v311 = vunpack.c.l.b16 %v150
  %v312 = vunpack.c.h.b16 %v150
  %v313 = vunpack.c.l.b16 %v151
  %v314 = vunpack.c.h.b16 %v151
  %v315 = vunpack.c.l.b16 %v152
  %v316 = vunpack.c.h.b16 %v152
  %v317 = vunpack.c.l.b16 %v153
  %v318 = vunpack.c.h.b16 %v153
  %v319 = vunpack.c.l.b16 %v154
  %v320 = vunpack.c.h.b16 %v154
  %v321 = vunpack.c.l.b16 %v155
  %v322 = vunpack.c.h.b16 %v155
  %v323 = vunpack.c.l.b16 %v156
  %v324 = vunpack.c.h.b16 %v156
  %v325 = vunpack.c.l.b16 %v157
  %v326 = vunpack.c.h.b16 %v157
  %v327 = vunpack.c.l.b16 %v158
  %v328 = vunpack.c.h.b16 %v158
  %v329 = vunpack.c.l.b16 %v159
  %v330 = vunpack.c.h.b16 %v159
  %v331 = vunpack.c.l.b16 %v160
  %v332 = vunpack.c.h.b16 %v160
  %v333 = vunpack.c.l.b16 %v161
  %v334 = vunpack.c.h.b16 %v161
  %v335 = vunpack.c.l.b16 %v162
  %v336 = vunpack.c.h.b16 %v162
  %v337 = vunpack.c.l.b16 %v163
  %v338 = vunpack.c.h.b16 %v163
  %v339 = vunpack.c.l.b16 %v164
  %v340 = vunpack.c.h.b16 %v164
  %v341 = vunpack.c.l.b16 %v165
  %v342 = vunpack.c.h.b16 %v165
  %v343 = vunpack.c.l.b16 %v166
  %v344 = vunpack.c.h.b16 %v166
  %v345 = vunpack.c.l.b16 %v167
  %v346 = vunpack.c.h.b16 %v167
  %v347 = vunpack.c.l.b16 %v168
  %v348 = vunpack.c.h.b16 %v168
  %v349 = vunpack.c.l.b16 %v169
  %v350 = vunpack.c.h.b16 %v169
  %v351 = vunpack.c.l.b16 %v170
  %v352 = vunpack.c.h.b16 %v170
  %v353 = vunpack.c.l.b16 %v171
  %v354 = vunpack.c.h.b16 %v171
  %v355 = vunpack.c.l.b16 %v172
  %v356 = vunpack.c.h.b16 %v172
  %v357 = vunpack.c.l.b16 %v173
  %v358 = vunpack.c.h.b16 %v173
  %v359 = vunpack.c.l.b16 %v174
  %v360 = vunpack.c.h.b16 %v174
  %v361 = vunpack.c.l.b16 %v175
  %v362 = vunpack.c.h.b16 %v175
  %v363 = vunpack.c.l.b16 %v176
  %v364 = vunpack.c.h.b16 %v176
  %v365 = vunpack.c.l.b16 %v177
  %v366 = vunpack.c.h.b16 %v177
  %v367 = vunpack.c.l.b16 %v178
  %v368 = vunpack.c.h.b16 %v178
  %v369 = vunpack.c.l.b16 %v179
  %v370 = vunpack.c.h.b16 %v179
  %v371 = vunpack.c.l.b16 %v180
  %v372 = vunpack.c.h.b16 %v180
  %v373 = vunpack.c.l.b16 %v181
  %v374 = vunpack.c.h.b16 %v181
  %v375 = vunpack.c.l.b16 %v182
  %v376 = vunpack.c.h.b16 %v182
  %v377 = vunpack.c.l.b16 %v183
  %v378 = vunpack.c.h.b16 %v183
  %v379 = vunpack.c.l.b16 %v184
  %v380 = vunpack.c.h.b16 %v184
  %v381 = vunpack.c.l.b16 %v185
  %v382 = vunpack.c.h.b16 %v185
  %v383 = vunpack.c.l.b16 %v186
  %v384 = vunpack.c.h.b16 %v186
  %v385 = vunpack.c.l.b16 %v187
  %v386 = vunpack.c.h.b16 %v187
  %v387 = vunpack.c.l.b16 %v188
  %v388 = vunpack.c.h.b16 %v188
  %v389 = vunpack.c.l.b16 %v189
  %v390 = vunpack.c.h.b16 %v189
  %v391 = vunpack.c.l.b16 %v190
  %v392 = vunpack.c.h.b16 %v190
  %v393 = vunpack.c.l.b16 %v191
  %v394 = vunpack.c.h.b16 %v191
  %v395 = vunpack.c.l.b16 %v192
  %v396 = vunpack.c.h.b16 %v192
  %v397 = vunpack.c.l.b16 %v193
  %v398 = vunpack.c.h.b16 %v193
  %v399 = vunpack.c.l.b16 %v194
  %v400 = vunpack.c.h.b16 %v194
  %v401 = vunpack.c.l.b16 %v195
  %v402 = vunpack.c.h.b16 %v195
  %v403 = vunpack.c.l.b16 %v196
  %v404 = vunpack.c.h.b16 %v196
  %v405 = vunpack.c.l.b16 %v197
  %v406 = vunpack.c.h.b16 %v197
  %v407 = vunpack.c.l.b16 %v198
  %v408 = vunpack.c.h.b16 %v198
  %v409 = vunpack.c.l.b16 %v199
  %v410 = vunpack.c.h.b16 %v199
  %v411 = vunpack.c.l.b16 %v200
  %v412 = vunpack.c.h.b16 %v200
  %v413 = vunpack.c.l.b16 %v201
  %v414 = vunpack.c.h.b16 %v201
  %v415 = vunpack.c.l.b16 %v202
  %v416 = vunpack.c.h.b16 %v202
  %v417 = vunpack.c.l.b16 %v203
  %v418 = vunpack.c.h.b16 %v203
  %v419 = vunpack.c.l.b16 %v204
  %v420 = vunpack.c.h.b16 %v204
  %v421 = vunpack.c.l.b16 %v205
  %v422 = vunpack.c.h.b16 %v205
  %v423 = vunpack.c.l.b16 %v206
  %v424 = vunpack.c.h.b16 %v206
  %v425 = vunpack.c.l.b16 %v207
  %v426 = vunpack.c.h.b16 %v207
  %v427 = vunpack.c.l.b16 %v208
  %v428 = vunpack.c.h.b16 %v208
  %v429 = vunpack.c.l.b16 %v209
  %v430 = vunpack.c.h.b16 %v209
  %v431 = vunpack.c.l.b16 %v210
  %v432 = vunpack.c.h.b16 %v210
  %v433 = vunpack.c.l.b16 %v211
  %v434 = vunpack.c.h.b16 %v211
  %v435 = vunpack.c.l.b16 %v212
  %v436 = vunpack.c.h.b16 %v212
  %v437 = vpack.c.b16 %v311, %v309
  %v438 = vpack.c.b16 %v312, %v310
  %v439 = vpack.c.b16 %v315, %v313
  %v440 = vpack.c.b16 %v316, %v314
  %v441 = vpack.c.b16 %v319, %v317
  %v442 = vpack.c.b16 %v320, %v318
  %v443 = vpack.c.b16 %v323, %v321
  %v444 = vpack.c.b16 %v324, %v322
  %v445 = vpack.c.b16 %v327, %v325
  %v446 = vpack.c.b16 %v328, %v326
  %v447 = vpack.c.b16 %v331, %v329
  %v448 = vpack.c.b16 %v332, %v330
  %v449 = vpack.c.b16 %v335, %v333
  %v450 = vpack.c.b16 %v336, %v334
  %v451 = vpack.c.b16 %v339, %v337
  %v452 = vpack.c.b16 %v340, %v338
  %v453 = vpack.c.b16 %v343, %v341
  %v454 = vpack.c.b16 %v344, %v342
  %v455 = vpack.c.b16 %v347, %v345
  %v456 = vpack.c.b16 %v348, %v346
  %v457 = vpack.c.b16 %v351, %v349
  %v458 = vpack.c.b16 %v352, %v350
  %v459 = vpack.c.b16 %v355, %v353
  %v460 = vpack.c.b16 %v356, %v354
  %v461 = vpack.c.b16 %v359, %v357
  %v462 = vpack.c.b16 %v360, %v358
  %v463 = vpack.c.b16 %v363, %v361
  %v464 = vpack.c.b16 %v364, %v362
  %v465 = vpack.c.b16 %v367, %v365
  %v466 = vpack.c.b16 %v368, %v366
  %v467 = vpack.c.b16 %v371, %v369
  %v468 = vpack.c.b16 %v372, %v370
  %v469 = vpack.c.b16 %v375, %v373
  %v470 = vpack.c.b16 %v376, %v374
  %v471 = vpack.c.b16 %v379, %v377
  %v472 = vpack.c.b16 %v380, %v378
  %v473 = vpack.c.b16 %v383, %v381
  %v474 = vpack.c.b16 %v384, %v382
  %v475 = vpack.c.b16 %v387, %v385
  %v476 = vpack.c.b16 %v388, %v386
  %v477 = vpack.c.b16 %v391, %v389
  %v478 = vpack.c.b16 %v392, %v390
  %v479 = vpack.c.b16 %v395, %v393
  %v480 = vpack.c.b16 %v396, %v394
  %v481 = vpack.c.b16 %v399, %v397
  %v482 = vpack.c.b16 %v400, %v398
  %v483 = vpack.c.b16 %v403, %v401
  %v484 = vpack.c.b16 %v404, %v402
  %v485 = vpack.c.b16 %v407, %v405
  %v486 = vpack.c.b16 %v408, %v406
  %v487 = vpack.c.b16 %v411, %v409
  %v488 = vpack.c.b16 %v412, %v410
  %v489 = vpack.c.b16 %v415, %v413
  %v490 = vpack.c.b16 %v416, %v414
  %v491 = vpack.c.b16 %v419, %v417
  %v492 = vpack.c.b16 %v420, %v418
  %v493 = vpack.c.b16 %v423, %v421
  %v494 = vpack.c.b16 %v424, %v422
  %v495 = vpack.c.b16 %v427, %v425
  %v496 = vpack.c.b16 %v428, %v426
  %v497 = vpack.c.b16 %v431, %v429
  %v498 = vpack.c.b16 %v432, %v430
  %v499 = vpack.c.b16 %v435, %v433
  %v500 = vpack.c.b16 %v436, %v434
  %v597 = vunpack.c.l.b16 %v213
  %v598 = vunpack.c.l.b16 %v214
  %v599 = vunpack.c.l.b16 %v215
  %v600 = vunpack.c.l.b16 %v216
  %v601 = vunpack.c.l.b16 %v217
  %v602 = vunpack.c.l.b16 %v218
  %v603 = vunpack.c.l.b16 %v219
  %v604 = vunpack.c.l.b16 %v220
  %v605 = vunpack.c.l.b16 %v221
  %v606 = vunpack.c.l.b16 %v222
  %v607 = vunpack.c.l.b16 %v223
  %v608 = vunpack.c.l.b16 %v224
  %v609 = vunpack.c.l.b16 %v225
  %v610 = vunpack.c.l.b16 %v226
  %v611 = vunpack.c.l.b16 %v227
  %v612 = vunpack.c.l.b16 %v228
  %v613 = vunpack.c.l.b16 %v229
  %v614 = vunpack.c.l.b16 %v230
  %v615 = vunpack.c.l.b16 %v231
  %v616 = vunpack.c.l.b16 %v232
  %v617 = vunpack.c.l.b16 %v233
  %v618 = vunpack.c.l.b16 %v234
  %v619 = vunpack.c.l.b16 %v235
  %v620 = vunpack.c.l.b16 %v236
  %v621 = vunpack.c.l.b16 %v237
  %v622 = vunpack.c.l.b16 %v238
  %v623 = vunpack.c.l.b16 %v239
  %v624 = vunpack.c.l.b16 %v240
  %v625 = vunpack.c.l.b16 %v241
  %v626 = vunpack.c.l.b16 %v242
  %v627 = vunpack.c.l.b16 %v243
  %v628 = vunpack.c.l.b16 %v244
  %v629 = vpack.c.b16 %v598, %v597
  %v630 = vpack.c.b16 %v600, %v599
  %v631 = vpack.c.b16 %v602, %v601
  %v632 = vpack.c.b16 %v604, %v603
  %v633 = vpack.c.b16 %v606, %v605
  %v634 = vpack.c.b16 %v608, %v607
  %v635 = vpack.c.b16 %v610, %v609
  %v636 = vpack.c.b16 %v612, %v611
  %v637 = vpack.c.b16 %v614, %v613
  %v638 = vpack.c.b16 %v616, %v615
  %v639 = vpack.c.b16 %v618, %v617
  %v640 = vpack.c.b16 %v620, %v619
  %v641 = vpack.c.b16 %v622, %v621
  %v642 = vpack.c.b16 %v624, %v623
  %v643 = vpack.c.b16 %v626, %v625
  %v644 = vpack.c.b16 %v628, %v627
  %661 = vmatpush.bf16.msra.mxu0 %v636
  %662 = vmatpush.bf16.msra.mxu0 %v635
  %663 = vmatpush.bf16.msra.mxu0 %v634
  %664 = vmatpush.bf16.msra.mxu0 %v633
  %665 = vmatpush.bf16.msra.mxu0 %v632
  %666 = vmatpush.bf16.msra.mxu0 %v631
  %667 = vmatpush.bf16.msra.mxu0 %v630
  %668 = vmatpush.bf16.msra.mxu0 %v629
  %669 = vmatmul.bf16.gmra.mxu0 %v437
  %v670 = vpop.f32.mrf.mxu0
  %v671 = vadd.f32 0.0, %v670
  %v672 = vpop.f32.mrf.mxu0
  %v673 = vadd.f32 0.0, %v672
  %674 = vmatmul.bf16.gmra.mxu0 %v439
  %v675 = vpop.f32.mrf.mxu0
  %v676 = vadd.f32 0.0, %v675
  %v677 = vpop.f32.mrf.mxu0
  %v678 = vadd.f32 0.0, %v677
  %679 = vmatmul.bf16.gmra.mxu0 %v441
  %v680 = vpop.f32.mrf.mxu0
  %v681 = vadd.f32 0.0, %v680
  %v682 = vpop.f32.mrf.mxu0
  %v683 = vadd.f32 0.0, %v682
  %684 = vmatmul.bf16.gmra.mxu0 %v443
  %v685 = vpop.f32.mrf.mxu0
  %v686 = vadd.f32 0.0, %v685
  %v687 = vpop.f32.mrf.mxu0
  %v688 = vadd.f32 0.0, %v687
  %689 = vmatmul.bf16.gmra.mxu0 %v445
  %v690 = vpop.f32.mrf.mxu0
  %v691 = vadd.f32 0.0, %v690
  %v692 = vpop.f32.mrf.mxu0
  %v693 = vadd.f32 0.0, %v692
  %694 = vmatmul.bf16.gmra.mxu0 %v447
  %v695 = vpop.f32.mrf.mxu0
  %v696 = vadd.f32 0.0, %v695
  %v697 = vpop.f32.mrf.mxu0
  %v698 = vadd.f32 0.0, %v697
  %699 = vmatmul.bf16.gmra.mxu0 %v449
  %v700 = vpop.f32.mrf.mxu0
  %v701 = vadd.f32 0.0, %v700
  %v702 = vpop.f32.mrf.mxu0
  %v703 = vadd.f32 0.0, %v702
  %704 = vmatmul.bf16.gmra.mxu0 %v451
  %v705 = vpop.f32.mrf.mxu0
  %v706 = vadd.f32 0.0, %v705
  %v707 = vpop.f32.mrf.mxu0
  %v708 = vadd.f32 0.0, %v707
  %709 = vmatmul.bf16.gmra.mxu0 %v453
  %v710 = vpop.f32.mrf.mxu0
  %v711 = vadd.f32 0.0, %v710
  %v712 = vpop.f32.mrf.mxu0
  %v713 = vadd.f32 0.0, %v712
  %714 = vmatmul.bf16.gmra.mxu0 %v455
  %v715 = vpop.f32.mrf.mxu0
  %v716 = vadd.f32 0.0, %v715
  %v717 = vpop.f32.mrf.mxu0
  %v718 = vadd.f32 0.0, %v717
  %719 = vmatmul.bf16.gmra.mxu0 %v457
  %v720 = vpop.f32.mrf.mxu0
  %v721 = vadd.f32 0.0, %v720
  %v722 = vpop.f32.mrf.mxu0
  %v723 = vadd.f32 0.0, %v722
  %724 = vmatmul.bf16.gmra.mxu0 %v459
  %v725 = vpop.f32.mrf.mxu0
  %v726 = vadd.f32 0.0, %v725
  %v727 = vpop.f32.mrf.mxu0
  %v728 = vadd.f32 0.0, %v727
  %729 = vmatmul.bf16.gmra.mxu0 %v461
  %v730 = vpop.f32.mrf.mxu0
  %v731 = vadd.f32 0.0, %v730
  %v732 = vpop.f32.mrf.mxu0
  %v733 = vadd.f32 0.0, %v732
  %734 = vmatmul.bf16.gmra.mxu0 %v463
  %v735 = vpop.f32.mrf.mxu0
  %v736 = vadd.f32 0.0, %v735
  %v737 = vpop.f32.mrf.mxu0
  %v738 = vadd.f32 0.0, %v737
  %739 = vmatmul.bf16.gmra.mxu0 %v465
  %v740 = vpop.f32.mrf.mxu0
  %v741 = vadd.f32 0.0, %v740
  %v742 = vpop.f32.mrf.mxu0
  %v743 = vadd.f32 0.0, %v742
  %744 = vmatmul.bf16.gmra.mxu0 %v467
  %v745 = vpop.f32.mrf.mxu0
  %v746 = vadd.f32 0.0, %v745
  %v747 = vpop.f32.mrf.mxu0
  %v748 = vadd.f32 0.0, %v747
  %749 = vmatmul.bf16.gmra.mxu0 %v469
  %v750 = vpop.f32.mrf.mxu0
  %v751 = vadd.f32 0.0, %v750
  %v752 = vpop.f32.mrf.mxu0
  %v753 = vadd.f32 0.0, %v752
  %754 = vmatmul.bf16.gmra.mxu0 %v471
  %v755 = vpop.f32.mrf.mxu0
  %v756 = vadd.f32 0.0, %v755
  %v757 = vpop.f32.mrf.mxu0
  %v758 = vadd.f32 0.0, %v757
  %759 = vmatmul.bf16.gmra.mxu0 %v473
  %v760 = vpop.f32.mrf.mxu0
  %v761 = vadd.f32 0.0, %v760
  %v762 = vpop.f32.mrf.mxu0
  %v763 = vadd.f32 0.0, %v762
  %764 = vmatmul.bf16.gmra.mxu0 %v475
  %v765 = vpop.f32.mrf.mxu0
  %v766 = vadd.f32 0.0, %v765
  %v767 = vpop.f32.mrf.mxu0
  %v768 = vadd.f32 0.0, %v767
  %769 = vmatmul.bf16.gmra.mxu0 %v477
  %v770 = vpop.f32.mrf.mxu0
  %v771 = vadd.f32 0.0, %v770
  %v772 = vpop.f32.mrf.mxu0
  %v773 = vadd.f32 0.0, %v772
  %774 = vmatmul.bf16.gmra.mxu0 %v479
  %v775 = vpop.f32.mrf.mxu0
  %v776 = vadd.f32 0.0, %v775
  %v777 = vpop.f32.mrf.mxu0
  %v778 = vadd.f32 0.0, %v777
  %779 = vmatmul.bf16.gmra.mxu0 %v481
  %v780 = vpop.f32.mrf.mxu0
  %v781 = vadd.f32 0.0, %v780
  %v782 = vpop.f32.mrf.mxu0
  %v783 = vadd.f32 0.0, %v782
  %784 = vmatmul.bf16.gmra.mxu0 %v483
  %v785 = vpop.f32.mrf.mxu0
  %v786 = vadd.f32 0.0, %v785
  %v787 = vpop.f32.mrf.mxu0
  %v788 = vadd.f32 0.0, %v787
  %789 = vmatmul.bf16.gmra.mxu0 %v485
  %v790 = vpop.f32.mrf.mxu0
  %v791 = vadd.f32 0.0, %v790
  %v792 = vpop.f32.mrf.mxu0
  %v793 = vadd.f32 0.0, %v792
  %794 = vmatmul.bf16.gmra.mxu0 %v487
  %v795 = vpop.f32.mrf.mxu0
  %v796 = vadd.f32 0.0, %v795
  %v797 = vpop.f32.mrf.mxu0
  %v798 = vadd.f32 0.0, %v797
  %799 = vmatmul.bf16.gmra.mxu0 %v489
  %v800 = vpop.f32.mrf.mxu0
  %v801 = vadd.f32 0.0, %v800
  %v802 = vpop.f32.mrf.mxu0
  %v803 = vadd.f32 0.0, %v802
  %804 = vmatmul.bf16.gmra.mxu0 %v491
  %v805 = vpop.f32.mrf.mxu0
  %v806 = vadd.f32 0.0, %v805
  %v807 = vpop.f32.mrf.mxu0
  %v808 = vadd.f32 0.0, %v807
  %809 = vmatmul.bf16.gmra.mxu0 %v493
  %v810 = vpop.f32.mrf.mxu0
  %v811 = vadd.f32 0.0, %v810
  %v812 = vpop.f32.mrf.mxu0
  %v813 = vadd.f32 0.0, %v812
  %814 = vmatmul.bf16.gmra.mxu0 %v495
  %v815 = vpop.f32.mrf.mxu0
  %v816 = vadd.f32 0.0, %v815
  %v817 = vpop.f32.mrf.mxu0
  %v818 = vadd.f32 0.0, %v817
  %819 = vmatmul.bf16.gmra.mxu0 %v497
  %v820 = vpop.f32.mrf.mxu0
  %v821 = vadd.f32 0.0, %v820
  %v822 = vpop.f32.mrf.mxu0
  %v823 = vadd.f32 0.0, %v822
  %824 = vmatmul.bf16.gmra.mxu0 %v499
  %v825 = vpop.f32.mrf.mxu0
  %v826 = vadd.f32 0.0, %v825
  %v827 = vpop.f32.mrf.mxu0
  %v828 = vadd.f32 0.0, %v827
  %829 = vdwg.mxu0
  %830 = vmatpush.bf16.msra.mxu0 %v644
  %831 = vmatpush.bf16.msra.mxu0 %v643
  %832 = vmatpush.bf16.msra.mxu0 %v642
  %833 = vmatpush.bf16.msra.mxu0 %v641
  %834 = vmatpush.bf16.msra.mxu0 %v640
  %835 = vmatpush.bf16.msra.mxu0 %v639
  %836 = vmatpush.bf16.msra.mxu0 %v638
  %837 = vmatpush.bf16.msra.mxu0 %v637
  %838 = vmatmul.bf16.gmra.mxu0 %v438
  %v839 = vpop.f32.mrf.mxu0
  %v840 = vadd.f32 %v671, %v839
  %v841 = vpop.f32.mrf.mxu0
  %v842 = vadd.f32 %v673, %v841
  %843 = vmatmul.bf16.gmra.mxu0 %v440
  %v844 = vpop.f32.mrf.mxu0
  %v845 = vadd.f32 %v676, %v844
  %v846 = vpop.f32.mrf.mxu0
  %v847 = vadd.f32 %v678, %v846
  %848 = vmatmul.bf16.gmra.mxu0 %v442
  %v849 = vpop.f32.mrf.mxu0
  %v850 = vadd.f32 %v681, %v849
  %v851 = vpop.f32.mrf.mxu0
  %v852 = vadd.f32 %v683, %v851
  %853 = vmatmul.bf16.gmra.mxu0 %v444
  %v854 = vpop.f32.mrf.mxu0
  %v855 = vadd.f32 %v686, %v854
  %v856 = vpop.f32.mrf.mxu0
  %v857 = vadd.f32 %v688, %v856
  %858 = vmatmul.bf16.gmra.mxu0 %v446
  %v859 = vpop.f32.mrf.mxu0
  %v860 = vadd.f32 %v691, %v859
  %v861 = vpop.f32.mrf.mxu0
  %v862 = vadd.f32 %v693, %v861
  %863 = vmatmul.bf16.gmra.mxu0 %v448
  %v864 = vpop.f32.mrf.mxu0
  %v865 = vadd.f32 %v696, %v864
  %v866 = vpop.f32.mrf.mxu0
  %v867 = vadd.f32 %v698, %v866
  %868 = vmatmul.bf16.gmra.mxu0 %v450
  %v869 = vpop.f32.mrf.mxu0
  %v870 = vadd.f32 %v701, %v869
  %v871 = vpop.f32.mrf.mxu0
  %v872 = vadd.f32 %v703, %v871
  %873 = vmatmul.bf16.gmra.mxu0 %v452
  %v874 = vpop.f32.mrf.mxu0
  %v875 = vadd.f32 %v706, %v874
  %v876 = vpop.f32.mrf.mxu0
  %v877 = vadd.f32 %v708, %v876
  %878 = vmatmul.bf16.gmra.mxu0 %v454
  %v879 = vpop.f32.mrf.mxu0
  %v880 = vadd.f32 %v711, %v879
  %v881 = vpop.f32.mrf.mxu0
  %v882 = vadd.f32 %v713, %v881
  %883 = vmatmul.bf16.gmra.mxu0 %v456
  %v884 = vpop.f32.mrf.mxu0
  %v885 = vadd.f32 %v716, %v884
  %v886 = vpop.f32.mrf.mxu0
  %v887 = vadd.f32 %v718, %v886
  %888 = vmatmul.bf16.gmra.mxu0 %v458
  %v889 = vpop.f32.mrf.mxu0
  %v890 = vadd.f32 %v721, %v889
  %v891 = vpop.f32.mrf.mxu0
  %v892 = vadd.f32 %v723, %v891
  %893 = vmatmul.bf16.gmra.mxu0 %v460
  %v894 = vpop.f32.mrf.mxu0
  %v895 = vadd.f32 %v726, %v894
  %v896 = vpop.f32.mrf.mxu0
  %v897 = vadd.f32 %v728, %v896
  %898 = vmatmul.bf16.gmra.mxu0 %v462
  %v899 = vpop.f32.mrf.mxu0
  %v900 = vadd.f32 %v731, %v899
  %v901 = vpop.f32.mrf.mxu0
  %v902 = vadd.f32 %v733, %v901
  %903 = vmatmul.bf16.gmra.mxu0 %v464
  %v904 = vpop.f32.mrf.mxu0
  %v905 = vadd.f32 %v736, %v904
  %v906 = vpop.f32.mrf.mxu0
  %v907 = vadd.f32 %v738, %v906
  %908 = vmatmul.bf16.gmra.mxu0 %v466
  %v909 = vpop.f32.mrf.mxu0
  %v910 = vadd.f32 %v741, %v909
  %v911 = vpop.f32.mrf.mxu0
  %v912 = vadd.f32 %v743, %v911
  %913 = vmatmul.bf16.gmra.mxu0 %v468
  %v914 = vpop.f32.mrf.mxu0
  %v915 = vadd.f32 %v746, %v914
  %v916 = vpop.f32.mrf.mxu0
  %v917 = vadd.f32 %v748, %v916
  %918 = vmatmul.bf16.gmra.mxu0 %v470
  %v919 = vpop.f32.mrf.mxu0
  %v920 = vadd.f32 %v751, %v919
  %v921 = vpop.f32.mrf.mxu0
  %v922 = vadd.f32 %v753, %v921
  %923 = vmatmul.bf16.gmra.mxu0 %v472
  %v924 = vpop.f32.mrf.mxu0
  %v925 = vadd.f32 %v756, %v924
  %v926 = vpop.f32.mrf.mxu0
  %v927 = vadd.f32 %v758, %v926
  %928 = vmatmul.bf16.gmra.mxu0 %v474
  %v929 = vpop.f32.mrf.mxu0
  %v930 = vadd.f32 %v761, %v929
  %v931 = vpop.f32.mrf.mxu0
  %v932 = vadd.f32 %v763, %v931
  %933 = vmatmul.bf16.gmra.mxu0 %v476
  %v934 = vpop.f32.mrf.mxu0
  %v935 = vadd.f32 %v766, %v934
  %v936 = vpop.f32.mrf.mxu0
  %v937 = vadd.f32 %v768, %v936
  %938 = vmatmul.bf16.gmra.mxu0 %v478
  %v939 = vpop.f32.mrf.mxu0
  %v940 = vadd.f32 %v771, %v939
  %v941 = vpop.f32.mrf.mxu0
  %v942 = vadd.f32 %v773, %v941
  %943 = vmatmul.bf16.gmra.mxu0 %v480
  %v944 = vpop.f32.mrf.mxu0
  %v945 = vadd.f32 %v776, %v944
  %v946 = vpop.f32.mrf.mxu0
  %v947 = vadd.f32 %v778, %v946
  %948 = vmatmul.bf16.gmra.mxu0 %v482
  %v949 = vpop.f32.mrf.mxu0
  %v950 = vadd.f32 %v781, %v949
  %v951 = vpop.f32.mrf.mxu0
  %v952 = vadd.f32 %v783, %v951
  %953 = vmatmul.bf16.gmra.mxu0 %v484
  %v954 = vpop.f32.mrf.mxu0
  %v955 = vadd.f32 %v786, %v954
  %v956 = vpop.f32.mrf.mxu0
  %v957 = vadd.f32 %v788, %v956
  %958 = vmatmul.bf16.gmra.mxu0 %v486
  %v959 = vpop.f32.mrf.mxu0
  %v960 = vadd.f32 %v791, %v959
  %v961 = vpop.f32.mrf.mxu0
  %v962 = vadd.f32 %v793, %v961
  %963 = vmatmul.bf16.gmra.mxu0 %v488
  %v964 = vpop.f32.mrf.mxu0
  %v965 = vadd.f32 %v796, %v964
  %v966 = vpop.f32.mrf.mxu0
  %v967 = vadd.f32 %v798, %v966
  %968 = vmatmul.bf16.gmra.mxu0 %v490
  %v969 = vpop.f32.mrf.mxu0
  %v970 = vadd.f32 %v801, %v969
  %v971 = vpop.f32.mrf.mxu0
  %v972 = vadd.f32 %v803, %v971
  %973 = vmatmul.bf16.gmra.mxu0 %v492
  %v974 = vpop.f32.mrf.mxu0
  %v975 = vadd.f32 %v806, %v974
  %v976 = vpop.f32.mrf.mxu0
  %v977 = vadd.f32 %v808, %v976
  %978 = vmatmul.bf16.gmra.mxu0 %v494
  %v979 = vpop.f32.mrf.mxu0
  %v980 = vadd.f32 %v811, %v979
  %v981 = vpop.f32.mrf.mxu0
  %v982 = vadd.f32 %v813, %v981
  %983 = vmatmul.bf16.gmra.mxu0 %v496
  %v984 = vpop.f32.mrf.mxu0
  %v985 = vadd.f32 %v816, %v984
  %v986 = vpop.f32.mrf.mxu0
  %v987 = vadd.f32 %v818, %v986
  %988 = vmatmul.bf16.gmra.mxu0 %v498
  %v989 = vpop.f32.mrf.mxu0
  %v990 = vadd.f32 %v821, %v989
  %v991 = vpop.f32.mrf.mxu0
  %v992 = vadd.f32 %v823, %v991
  %993 = vmatmul.bf16.gmra.mxu0 %v500
  %v994 = vpop.f32.mrf.mxu0
  %v995 = vadd.f32 %v826, %v994
  %v996 = vpop.f32.mrf.mxu0
  %v997 = vadd.f32 %v828, %v996
  %998 = vdwg.mxu0
  %v999 = vadd.f32 %v85, %v840
  %v1000 = vadd.f32 %v86, %v842
  %v1001 = vadd.f32 %v87, %v845
  %v1002 = vadd.f32 %v88, %v847
  %v1003 = vadd.f32 %v89, %v850
  %v1004 = vadd.f32 %v90, %v852
  %v1005 = vadd.f32 %v91, %v855
  %v1006 = vadd.f32 %v92, %v857
  %v1007 = vadd.f32 %v93, %v860
  %v1008 = vadd.f32 %v94, %v862
  %v1009 = vadd.f32 %v95, %v865
  %v1010 = vadd.f32 %v96, %v867
  %v1011 = vadd.f32 %v97, %v870
  %v1012 = vadd.f32 %v98, %v872
  %v1013 = vadd.f32 %v99, %v875
  %v1014 = vadd.f32 %v100, %v877
  %v1015 = vadd.f32 %v101, %v880
  %v1016 = vadd.f32 %v102, %v882
  %v1017 = vadd.f32 %v103, %v885
  %v1018 = vadd.f32 %v104, %v887
  %v1019 = vadd.f32 %v105, %v890
  %v1020 = vadd.f32 %v106, %v892
  %v1021 = vadd.f32 %v107, %v895
  %v1022 = vadd.f32 %v108, %v897
  %v1023 = vadd.f32 %v109, %v900
  %v1024 = vadd.f32 %v110, %v902
  %v1025 = vadd.f32 %v111, %v905
  %v1026 = vadd.f32 %v112, %v907
  %v1027 = vadd.f32 %v113, %v910
  %v1028 = vadd.f32 %v114, %v912
  %v1029 = vadd.f32 %v115, %v915
  %v1030 = vadd.f32 %v116, %v917
  %v1031 = vadd.f32 %v117, %v920
  %v1032 = vadd.f32 %v118, %v922
  %v1033 = vadd.f32 %v119, %v925
  %v1034 = vadd.f32 %v120, %v927
  %v1035 = vadd.f32 %v121, %v930
  %v1036 = vadd.f32 %v122, %v932
  %v1037 = vadd.f32 %v123, %v935
  %v1038 = vadd.f32 %v124, %v937
  %v1039 = vadd.f32 %v125, %v940
  %v1040 = vadd.f32 %v126, %v942
  %v1041 = vadd.f32 %v127, %v945
  %v1042 = vadd.f32 %v128, %v947
  %v1043 = vadd.f32 %v129, %v950
  %v1044 = vadd.f32 %v130, %v952
  %v1045 = vadd.f32 %v131, %v955
  %v1046 = vadd.f32 %v132, %v957
  %v1047 = vadd.f32 %v133, %v960
  %v1048 = vadd.f32 %v134, %v962
  %v1049 = vadd.f32 %v135, %v965
  %v1050 = vadd.f32 %v136, %v967
  %v1051 = vadd.f32 %v137, %v970
  %v1052 = vadd.f32 %v138, %v972
  %v1053 = vadd.f32 %v139, %v975
  %v1054 = vadd.f32 %v140, %v977
  %v1055 = vadd.f32 %v141, %v980
  %v1056 = vadd.f32 %v142, %v982
  %v1057 = vadd.f32 %v143, %v985
  %v1058 = vadd.f32 %v144, %v987
  %v1059 = vadd.f32 %v145, %v990
  %v1060 = vadd.f32 %v146, %v992
  %v1061 = vadd.f32 %v147, %v995
  %v1062 = vadd.f32 %v148, %v997
  %1063 = vst [vmem:[#allocation2] sm:$0xff] %v999
  %1064 = vst [vmem:[#allocation2 + $0x8] sm:$0xff] %v1000
  %1065 = vst [vmem:[#allocation2 + $0x10] sm:$0xff] %v1001
  %1066 = vst [vmem:[#allocation2 + $0x18] sm:$0xff] %v1002
  %1067 = vst [vmem:[#allocation2 + $0x20] sm:$0xff] %v1003
  %1068 = vst [vmem:[#allocation2 + $0x28] sm:$0xff] %v1004
  %1069 = vst [vmem:[#allocation2 + $0x30] sm:$0xff] %v1005
  %1070 = vst [vmem:[#allocation2 + $0x38] sm:$0xff] %v1006
  %1071 = vst [vmem:[#allocation2 + $0x40] sm:$0xff] %v1007
  %1072 = vst [vmem:[#allocation2 + $0x48] sm:$0xff] %v1008
  %1073 = vst [vmem:[#allocation2 + $0x50] sm:$0xff] %v1009
  %1074 = vst [vmem:[#allocation2 + $0x58] sm:$0xff] %v1010
  %1075 = vst [vmem:[#allocation2 + $0x60] sm:$0xff] %v1011
  %1076 = vst [vmem:[#allocation2 + $0x68] sm:$0xff] %v1012
  %1077 = vst [vmem:[#allocation2 + $0x70] sm:$0xff] %v1013
  %1078 = vst [vmem:[#allocation2 + $0x78] sm:$0xff] %v1014
  %1079 = vst [vmem:[#allocation2 + $0x80] sm:$0xff] %v1015
  %1080 = vst [vmem:[#allocation2 + $0x88] sm:$0xff] %v1016
  %1081 = vst [vmem:[#allocation2 + $0x90] sm:$0xff] %v1017
  %1082 = vst [vmem:[#allocation2 + $0x98] sm:$0xff] %v1018
  %1083 = vst [vmem:[#allocation2 + $0xa0] sm:$0xff] %v1019
  %1084 = vst [vmem:[#allocation2 + $0xa8] sm:$0xff] %v1020
  %1085 = vst [vmem:[#allocation2 + $0xb0] sm:$0xff] %v1021
  %1086 = vst [vmem:[#allocation2 + $0xb8] sm:$0xff] %v1022
  %1087 = vst [vmem:[#allocation2 + $0xc0] sm:$0xff] %v1023
  %1088 = vst [vmem:[#allocation2 + $0xc8] sm:$0xff] %v1024
  %1089 = vst [vmem:[#allocation2 + $0xd0] sm:$0xff] %v1025
  %1090 = vst [vmem:[#allocation2 + $0xd8] sm:$0xff] %v1026
  %1091 = vst [vmem:[#allocation2 + $0xe0] sm:$0xff] %v1027
  %1092 = vst [vmem:[#allocation2 + $0xe8] sm:$0xff] %v1028
  %1093 = vst [vmem:[#allocation2 + $0xf0] sm:$0xff] %v1029
  %1094 = vst [vmem:[#allocation2 + $0xf8] sm:$0xff] %v1030
  %1095 = vst [vmem:[#allocation2 + $0x100] sm:$0xff] %v1031
  %1096 = vst [vmem:[#allocation2 + $0x108] sm:$0xff] %v1032
  %1097 = vst [vmem:[#allocation2 + $0x110] sm:$0xff] %v1033
  %1098 = vst [vmem:[#allocation2 + $0x118] sm:$0xff] %v1034
  %1099 = vst [vmem:[#allocation2 + $0x120] sm:$0xff] %v1035
  %1100 = vst [vmem:[#allocation2 + $0x128] sm:$0xff] %v1036
  %1101 = vst [vmem:[#allocation2 + $0x130] sm:$0xff] %v1037
  %1102 = vst [vmem:[#allocation2 + $0x138] sm:$0xff] %v1038
  %1103 = vst [vmem:[#allocation2 + $0x140] sm:$0xff] %v1039
  %1104 = vst [vmem:[#allocation2 + $0x148] sm:$0xff] %v1040
  %1105 = vst [vmem:[#allocation2 + $0x150] sm:$0xff] %v1041
  %1106 = vst [vmem:[#allocation2 + $0x158] sm:$0xff] %v1042
  %1107 = vst [vmem:[#allocation2 + $0x160] sm:$0xff] %v1043
  %1108 = vst [vmem:[#allocation2 + $0x168] sm:$0xff] %v1044
  %1109 = vst [vmem:[#allocation2 + $0x170] sm:$0xff] %v1045
  %1110 = vst [vmem:[#allocation2 + $0x178] sm:$0xff] %v1046
  %1111 = vst [vmem:[#allocation2 + $0x180] sm:$0xff] %v1047
  %1112 = vst [vmem:[#allocation2 + $0x188] sm:$0xff] %v1048
  %1113 = vst [vmem:[#allocation2 + $0x190] sm:$0xff] %v1049
  %1114 = vst [vmem:[#allocation2 + $0x198] sm:$0xff] %v1050
  %1115 = vst [vmem:[#allocation2 + $0x1a0] sm:$0xff] %v1051
  %1116 = vst [vmem:[#allocation2 + $0x1a8] sm:$0xff] %v1052
  %1117 = vst [vmem:[#allocation2 + $0x1b0] sm:$0xff] %v1053
  %1118 = vst [vmem:[#allocation2 + $0x1b8] sm:$0xff] %v1054
  %1119 = vst [vmem:[#allocation2 + $0x1c0] sm:$0xff] %v1055
  %1120 = vst [vmem:[#allocation2 + $0x1c8] sm:$0xff] %v1056
  %1121 = vst [vmem:[#allocation2 + $0x1d0] sm:$0xff] %v1057
  %1122 = vst [vmem:[#allocation2 + $0x1d8] sm:$0xff] %v1058
  %1123 = vst [vmem:[#allocation2 + $0x1e0] sm:$0xff] %v1059
  %1124 = vst [vmem:[#allocation2 + $0x1e8] sm:$0xff] %v1060
  %1125 = vst [vmem:[#allocation2 + $0x1f0] sm:$0xff] %v1061
  %1126 = vst [vmem:[#allocation2 + $0x1f8] sm:$0xff] %v1062
  // Predicated region
  $region22: #{_matmul_bn.1} parent=0 // pred_check
    %p1127 = pneg %p17
  $region23: #{_matmul_bn.1} parent=0 // pred_check_branch
    %1129 = sbr.rel (%p1127) target = $region25
  $region24: #{_matmul_bn.1} parent=0 // pred_region
    %v1130 = vld [vmem:[#allocation2] sm:$0xff]
    %v1131 = vld [vmem:[#allocation2 + $0x8] sm:$0xff]
    %v1132 = vld [vmem:[#allocation2 + $0x10] sm:$0xff]
    %v1133 = vld [vmem:[#allocation2 + $0x18] sm:$0xff]
    %v1134 = vld [vmem:[#allocation2 + $0x20] sm:$0xff]
    %v1135 = vld [vmem:[#allocation2 + $0x28] sm:$0xff]
    %v1136 = vld [vmem:[#allocation2 + $0x30] sm:$0xff]
    %v1137 = vld [vmem:[#allocation2 + $0x38] sm:$0xff]
    %v1138 = vld [vmem:[#allocation2 + $0x40] sm:$0xff]
    %v1139 = vld [vmem:[#allocation2 + $0x48] sm:$0xff]
    %v1140 = vld [vmem:[#allocation2 + $0x50] sm:$0xff]
    %v1141 = vld [vmem:[#allocation2 + $0x58] sm:$0xff]
    %v1142 = vld [vmem:[#allocation2 + $0x60] sm:$0xff]
    %v1143 = vld [vmem:[#allocation2 + $0x68] sm:$0xff]
    %v1144 = vld [vmem:[#allocation2 + $0x70] sm:$0xff]
    %v1145 = vld [vmem:[#allocation2 + $0x78] sm:$0xff]
    %v1146 = vld [vmem:[#allocation2 + $0x80] sm:$0xff]
    %v1147 = vld [vmem:[#allocation2 + $0x88] sm:$0xff]
    %v1148 = vld [vmem:[#allocation2 + $0x90] sm:$0xff]
    %v1149 = vld [vmem:[#allocation2 + $0x98] sm:$0xff]
    %v1150 = vld [vmem:[#allocation2 + $0xa0] sm:$0xff]
    %v1151 = vld [vmem:[#allocation2 + $0xa8] sm:$0xff]
    %v1152 = vld [vmem:[#allocation2 + $0xb0] sm:$0xff]
    %v1153 = vld [vmem:[#allocation2 + $0xb8] sm:$0xff]
    %v1154 = vld [vmem:[#allocation2 + $0xc0] sm:$0xff]
    %v1155 = vld [vmem:[#allocation2 + $0xc8] sm:$0xff]
    %v1156 = vld [vmem:[#allocation2 + $0xd0] sm:$0xff]
    %v1157 = vld [vmem:[#allocation2 + $0xd8] sm:$0xff]
    %v1158 = vld [vmem:[#allocation2 + $0xe0] sm:$0xff]
    %v1159 = vld [vmem:[#allocation2 + $0xe8] sm:$0xff]
    %v1160 = vld [vmem:[#allocation2 + $0xf0] sm:$0xff]
    %v1161 = vld [vmem:[#allocation2 + $0xf8] sm:$0xff]
    %v1162 = vld [vmem:[#allocation2 + $0x100] sm:$0xff]
    %v1163 = vld [vmem:[#allocation2 + $0x108] sm:$0xff]
    %v1164 = vld [vmem:[#allocation2 + $0x110] sm:$0xff]
    %v1165 = vld [vmem:[#allocation2 + $0x118] sm:$0xff]
    %v1166 = vld [vmem:[#allocation2 + $0x120] sm:$0xff]
    %v1167 = vld [vmem:[#allocation2 + $0x128] sm:$0xff]
    %v1168 = vld [vmem:[#allocation2 + $0x130] sm:$0xff]
    %v1169 = vld [vmem:[#allocation2 + $0x138] sm:$0xff]
    %v1170 = vld [vmem:[#allocation2 + $0x140] sm:$0xff]
    %v1171 = vld [vmem:[#allocation2 + $0x148] sm:$0xff]
    %v1172 = vld [vmem:[#allocation2 + $0x150] sm:$0xff]
    %v1173 = vld [vmem:[#allocation2 + $0x158] sm:$0xff]
    %v1174 = vld [vmem:[#allocation2 + $0x160] sm:$0xff]
    %v1175 = vld [vmem:[#allocation2 + $0x168] sm:$0xff]
    %v1176 = vld [vmem:[#allocation2 + $0x170] sm:$0xff]
    %v1177 = vld [vmem:[#allocation2 + $0x178] sm:$0xff]
    %v1178 = vld [vmem:[#allocation2 + $0x180] sm:$0xff]
    %v1179 = vld [vmem:[#allocation2 + $0x188] sm:$0xff]
    %v1180 = vld [vmem:[#allocation2 + $0x190] sm:$0xff]
    %v1181 = vld [vmem:[#allocation2 + $0x198] sm:$0xff]
    %v1182 = vld [vmem:[#allocation2 + $0x1a0] sm:$0xff]
    %v1183 = vld [vmem:[#allocation2 + $0x1a8] sm:$0xff]
    %v1184 = vld [vmem:[#allocation2 + $0x1b0] sm:$0xff]
    %v1185 = vld [vmem:[#allocation2 + $0x1b8] sm:$0xff]
    %v1186 = vld [vmem:[#allocation2 + $0x1c0] sm:$0xff]
    %v1187 = vld [vmem:[#allocation2 + $0x1c8] sm:$0xff]
    %v1188 = vld [vmem:[#allocation2 + $0x1d0] sm:$0xff]
    %v1189 = vld [vmem:[#allocation2 + $0x1d8] sm:$0xff]
    %v1190 = vld [vmem:[#allocation2 + $0x1e0] sm:$0xff]
    %v1191 = vld [vmem:[#allocation2 + $0x1e8] sm:$0xff]
    %v1192 = vld [vmem:[#allocation2 + $0x1f0] sm:$0xff]
    %v1193 = vld [vmem:[#allocation2 + $0x1f8] sm:$0xff]
    %v1194 = vld [vmem:[%s2] sm:$0x1]
    %v1196 = vperm.slane %v1194, 0
    %v1198 = vmul.f32 %v1130, %v1196
    %v1199 = vmul.f32 %v1131, %v1196
    %v1200 = vmul.f32 %v1132, %v1196
    %v1201 = vmul.f32 %v1133, %v1196
    %v1202 = vmul.f32 %v1134, %v1196
    %v1203 = vmul.f32 %v1135, %v1196
    %v1204 = vmul.f32 %v1136, %v1196
    %v1205 = vmul.f32 %v1137, %v1196
    %v1206 = vmul.f32 %v1138, %v1196
    %v1207 = vmul.f32 %v1139, %v1196
    %v1208 = vmul.f32 %v1140, %v1196
    %v1209 = vmul.f32 %v1141, %v1196
    %v1210 = vmul.f32 %v1142, %v1196
    %v1211 = vmul.f32 %v1143, %v1196
    %v1212 = vmul.f32 %v1144, %v1196
    %v1213 = vmul.f32 %v1145, %v1196
    %v1214 = vmul.f32 %v1146, %v1196
    %v1215 = vmul.f32 %v1147, %v1196
    %v1216 = vmul.f32 %v1148, %v1196
    %v1217 = vmul.f32 %v1149, %v1196
    %v1218 = vmul.f32 %v1150, %v1196
    %v1219 = vmul.f32 %v1151, %v1196
    %v1220 = vmul.f32 %v1152, %v1196
    %v1221 = vmul.f32 %v1153, %v1196
    %v1222 = vmul.f32 %v1154, %v1196
    %v1223 = vmul.f32 %v1155, %v1196
    %v1224 = vmul.f32 %v1156, %v1196
    %v1225 = vmul.f32 %v1157, %v1196
    %v1226 = vmul.f32 %v1158, %v1196
    %v1227 = vmul.f32 %v1159, %v1196
    %v1228 = vmul.f32 %v1160, %v1196
    %v1229 = vmul.f32 %v1161, %v1196
    %v1230 = vmul.f32 %v1162, %v1196
    %v1231 = vmul.f32 %v1163, %v1196
    %v1232 = vmul.f32 %v1164, %v1196
    %v1233 = vmul.f32 %v1165, %v1196
    %v1234 = vmul.f32 %v1166, %v1196
    %v1235 = vmul.f32 %v1167, %v1196
    %v1236 = vmul.f32 %v1168, %v1196
    %v1237 = vmul.f32 %v1169, %v1196
    %v1238 = vmul.f32 %v1170, %v1196
    %v1239 = vmul.f32 %v1171, %v1196
    %v1240 = vmul.f32 %v1172, %v1196
    %v1241 = vmul.f32 %v1173, %v1196
    %v1242 = vmul.f32 %v1174, %v1196
    %v1243 = vmul.f32 %v1175, %v1196
    %v1244 = vmul.f32 %v1176, %v1196
    %v1245 = vmul.f32 %v1177, %v1196
    %v1246 = vmul.f32 %v1178, %v1196
    %v1247 = vmul.f32 %v1179, %v1196
    %v1248 = vmul.f32 %v1180, %v1196
    %v1249 = vmul.f32 %v1181, %v1196
    %v1250 = vmul.f32 %v1182, %v1196
    %v1251 = vmul.f32 %v1183, %v1196
    %v1252 = vmul.f32 %v1184, %v1196
    %v1253 = vmul.f32 %v1185, %v1196
    %v1254 = vmul.f32 %v1186, %v1196
    %v1255 = vmul.f32 %v1187, %v1196
    %v1256 = vmul.f32 %v1188, %v1196
    %v1257 = vmul.f32 %v1189, %v1196
    %v1258 = vmul.f32 %v1190, %v1196
    %v1259 = vmul.f32 %v1191, %v1196
    %v1260 = vmul.f32 %v1192, %v1196
    %v1261 = vmul.f32 %v1193, %v1196
    %v1262 = vld [vmem:[%s3] sm:$0x1]
    %v1264 = vperm.slane %v1262, 0
    %v1266 = vadd.f32 %v1198, %v1264
    %v1267 = vadd.f32 %v1199, %v1264
    %v1268 = vadd.f32 %v1200, %v1264
    %v1269 = vadd.f32 %v1201, %v1264
    %v1270 = vadd.f32 %v1202, %v1264
    %v1271 = vadd.f32 %v1203, %v1264
    %v1272 = vadd.f32 %v1204, %v1264
    %v1273 = vadd.f32 %v1205, %v1264
    %v1274 = vadd.f32 %v1206, %v1264
    %v1275 = vadd.f32 %v1207, %v1264
    %v1276 = vadd.f32 %v1208, %v1264
    %v1277 = vadd.f32 %v1209, %v1264
    %v1278 = vadd.f32 %v1210, %v1264
    %v1279 = vadd.f32 %v1211, %v1264
    %v1280 = vadd.f32 %v1212, %v1264
    %v1281 = vadd.f32 %v1213, %v1264
    %v1282 = vadd.f32 %v1214, %v1264
    %v1283 = vadd.f32 %v1215, %v1264
    %v1284 = vadd.f32 %v1216, %v1264
    %v1285 = vadd.f32 %v1217, %v1264
    %v1286 = vadd.f32 %v1218, %v1264
    %v1287 = vadd.f32 %v1219, %v1264
    %v1288 = vadd.f32 %v1220, %v1264
    %v1289 = vadd.f32 %v1221, %v1264
    %v1290 = vadd.f32 %v1222, %v1264
    %v1291 = vadd.f32 %v1223, %v1264
    %v1292 = vadd.f32 %v1224, %v1264
    %v1293 = vadd.f32 %v1225, %v1264
    %v1294 = vadd.f32 %v1226, %v1264
    %v1295 = vadd.f32 %v1227, %v1264
    %v1296 = vadd.f32 %v1228, %v1264
    %v1297 = vadd.f32 %v1229, %v1264
    %v1298 = vadd.f32 %v1230, %v1264
    %v1299 = vadd.f32 %v1231, %v1264
    %v1300 = vadd.f32 %v1232, %v1264
    %v1301 = vadd.f32 %v1233, %v1264
    %v1302 = vadd.f32 %v1234, %v1264
    %v1303 = vadd.f32 %v1235, %v1264
    %v1304 = vadd.f32 %v1236, %v1264
    %v1305 = vadd.f32 %v1237, %v1264
    %v1306 = vadd.f32 %v1238, %v1264
    %v1307 = vadd.f32 %v1239, %v1264
    %v1308 = vadd.f32 %v1240, %v1264
    %v1309 = vadd.f32 %v1241, %v1264
    %v1310 = vadd.f32 %v1242, %v1264
    %v1311 = vadd.f32 %v1243, %v1264
    %v1312 = vadd.f32 %v1244, %v1264
    %v1313 = vadd.f32 %v1245, %v1264
    %v1314 = vadd.f32 %v1246, %v1264
    %v1315 = vadd.f32 %v1247, %v1264
    %v1316 = vadd.f32 %v1248, %v1264
    %v1317 = vadd.f32 %v1249, %v1264
    %v1318 = vadd.f32 %v1250, %v1264
    %v1319 = vadd.f32 %v1251, %v1264
    %v1320 = vadd.f32 %v1252, %v1264
    %v1321 = vadd.f32 %v1253, %v1264
    %v1322 = vadd.f32 %v1254, %v1264
    %v1323 = vadd.f32 %v1255, %v1264
    %v1324 = vadd.f32 %v1256, %v1264
    %v1325 = vadd.f32 %v1257, %v1264
    %v1326 = vadd.f32 %v1258, %v1264
    %v1327 = vadd.f32 %v1259, %v1264
    %v1328 = vadd.f32 %v1260, %v1264
    %v1329 = vadd.f32 %v1261, %v1264
    %v1330 = vmax.f32 %v1266, 0.0
    %v1331 = vmax.f32 %v1267, 0.0
    %v1332 = vmax.f32 %v1268, 0.0
    %v1333 = vmax.f32 %v1269, 0.0
    %v1334 = vmax.f32 %v1270, 0.0
    %v1335 = vmax.f32 %v1271, 0.0
    %v1336 = vmax.f32 %v1272, 0.0
    %v1337 = vmax.f32 %v1273, 0.0
    %v1338 = vmax.f32 %v1274, 0.0
    %v1339 = vmax.f32 %v1275, 0.0
    %v1340 = vmax.f32 %v1276, 0.0
    %v1341 = vmax.f32 %v1277, 0.0
    %v1342 = vmax.f32 %v1278, 0.0
    %v1343 = vmax.f32 %v1279, 0.0
    %v1344 = vmax.f32 %v1280, 0.0
    %v1345 = vmax.f32 %v1281, 0.0
    %v1346 = vmax.f32 %v1282, 0.0
    %v1347 = vmax.f32 %v1283, 0.0
    %v1348 = vmax.f32 %v1284, 0.0
    %v1349 = vmax.f32 %v1285, 0.0
    %v1350 = vmax.f32 %v1286, 0.0
    %v1351 = vmax.f32 %v1287, 0.0
    %v1352 = vmax.f32 %v1288, 0.0
    %v1353 = vmax.f32 %v1289, 0.0
    %v1354 = vmax.f32 %v1290, 0.0
    %v1355 = vmax.f32 %v1291, 0.0
    %v1356 = vmax.f32 %v1292, 0.0
    %v1357 = vmax.f32 %v1293, 0.0
    %v1358 = vmax.f32 %v1294, 0.0
    %v1359 = vmax.f32 %v1295, 0.0
    %v1360 = vmax.f32 %v1296, 0.0
    %v1361 = vmax.f32 %v1297, 0.0
    %v1362 = vmax.f32 %v1298, 0.0
    %v1363 = vmax.f32 %v1299, 0.0
    %v1364 = vmax.f32 %v1300, 0.0
    %v1365 = vmax.f32 %v1301, 0.0
    %v1366 = vmax.f32 %v1302, 0.0
    %v1367 = vmax.f32 %v1303, 0.0
    %v1368 = vmax.f32 %v1304, 0.0
    %v1369 = vmax.f32 %v1305, 0.0
    %v1370 = vmax.f32 %v1306, 0.0
    %v1371 = vmax.f32 %v1307, 0.0
    %v1372 = vmax.f32 %v1308, 0.0
    %v1373 = vmax.f32 %v1309, 0.0
    %v1374 = vmax.f32 %v1310, 0.0
    %v1375 = vmax.f32 %v1311, 0.0
    %v1376 = vmax.f32 %v1312, 0.0
    %v1377 = vmax.f32 %v1313, 0.0
    %v1378 = vmax.f32 %v1314, 0.0
    %v1379 = vmax.f32 %v1315, 0.0
    %v1380 = vmax.f32 %v1316, 0.0
    %v1381 = vmax.f32 %v1317, 0.0
    %v1382 = vmax.f32 %v1318, 0.0
    %v1383 = vmax.f32 %v1319, 0.0
    %v1384 = vmax.f32 %v1320, 0.0
    %v1385 = vmax.f32 %v1321, 0.0
    %v1386 = vmax.f32 %v1322, 0.0
    %v1387 = vmax.f32 %v1323, 0.0
    %v1388 = vmax.f32 %v1324, 0.0
    %v1389 = vmax.f32 %v1325, 0.0
    %v1390 = vmax.f32 %v1326, 0.0
    %v1391 = vmax.f32 %v1327, 0.0
    %v1392 = vmax.f32 %v1328, 0.0
    %v1393 = vmax.f32 %v1329, 0.0
    %v1394 = vpack.c.bf16 %v1330, %v1330
    %v1395 = vpack.c.bf16 %v1331, %v1331
    %v1396 = vpack.c.bf16 %v1332, %v1332
    %v1397 = vpack.c.bf16 %v1333, %v1333
    %v1398 = vpack.c.bf16 %v1334, %v1334
    %v1399 = vpack.c.bf16 %v1335, %v1335
    %v1400 = vpack.c.bf16 %v1336, %v1336
    %v1401 = vpack.c.bf16 %v1337, %v1337
    %v1402 = vpack.c.bf16 %v1338, %v1338
    %v1403 = vpack.c.bf16 %v1339, %v1339
    %v1404 = vpack.c.bf16 %v1340, %v1340
    %v1405 = vpack.c.bf16 %v1341, %v1341
    %v1406 = vpack.c.bf16 %v1342, %v1342
    %v1407 = vpack.c.bf16 %v1343, %v1343
    %v1408 = vpack.c.bf16 %v1344, %v1344
    %v1409 = vpack.c.bf16 %v1345, %v1345
    %v1410 = vpack.c.bf16 %v1346, %v1346
    %v1411 = vpack.c.bf16 %v1347, %v1347
    %v1412 = vpack.c.bf16 %v1348, %v1348
    %v1413 = vpack.c.bf16 %v1349, %v1349
    %v1414 = vpack.c.bf16 %v1350, %v1350
    %v1415 = vpack.c.bf16 %v1351, %v1351
    %v1416 = vpack.c.bf16 %v1352, %v1352
    %v1417 = vpack.c.bf16 %v1353, %v1353
    %v1418 = vpack.c.bf16 %v1354, %v1354
    %v1419 = vpack.c.bf16 %v1355, %v1355
    %v1420 = vpack.c.bf16 %v1356, %v1356
    %v1421 = vpack.c.bf16 %v1357, %v1357
    %v1422 = vpack.c.bf16 %v1358, %v1358
    %v1423 = vpack.c.bf16 %v1359, %v1359
    %v1424 = vpack.c.bf16 %v1360, %v1360
    %v1425 = vpack.c.bf16 %v1361, %v1361
    %v1426 = vpack.c.bf16 %v1362, %v1362
    %v1427 = vpack.c.bf16 %v1363, %v1363
    %v1428 = vpack.c.bf16 %v1364, %v1364
    %v1429 = vpack.c.bf16 %v1365, %v1365
    %v1430 = vpack.c.bf16 %v1366, %v1366
    %v1431 = vpack.c.bf16 %v1367, %v1367
    %v1432 = vpack.c.bf16 %v1368, %v1368
    %v1433 = vpack.c.bf16 %v1369, %v1369
    %v1434 = vpack.c.bf16 %v1370, %v1370
    %v1435 = vpack.c.bf16 %v1371, %v1371
    %v1436 = vpack.c.bf16 %v1372, %v1372
    %v1437 = vpack.c.bf16 %v1373, %v1373
    %v1438 = vpack.c.bf16 %v1374, %v1374
    %v1439 = vpack.c.bf16 %v1375, %v1375
    %v1440 = vpack.c.bf16 %v1376, %v1376
    %v1441 = vpack.c.bf16 %v1377, %v1377
    %v1442 = vpack.c.bf16 %v1378, %v1378
    %v1443 = vpack.c.bf16 %v1379, %v1379
    %v1444 = vpack.c.bf16 %v1380, %v1380
    %v1445 = vpack.c.bf16 %v1381, %v1381
    %v1446 = vpack.c.bf16 %v1382, %v1382
    %v1447 = vpack.c.bf16 %v1383, %v1383
    %v1448 = vpack.c.bf16 %v1384, %v1384
    %v1449 = vpack.c.bf16 %v1385, %v1385
    %v1450 = vpack.c.bf16 %v1386, %v1386
    %v1451 = vpack.c.bf16 %v1387, %v1387
    %v1452 = vpack.c.bf16 %v1388, %v1388
    %v1453 = vpack.c.bf16 %v1389, %v1389
    %v1454 = vpack.c.bf16 %v1390, %v1390
    %v1455 = vpack.c.bf16 %v1391, %v1391
    %v1456 = vpack.c.bf16 %v1392, %v1392
    %v1457 = vpack.c.bf16 %v1393, %v1393
    %1458 = vst [vmem:[%s4] sm:$0xf] %v1394
    %1459 = vst [vmem:[%s4 + $0x4] sm:$0xf] %v1395
    %1460 = vst [vmem:[%s4 + $0x8] sm:$0xf] %v1396
    %1461 = vst [vmem:[%s4 + $0xc] sm:$0xf] %v1397
    %1462 = vst [vmem:[%s4 + $0x10] sm:$0xf] %v1398
    %1463 = vst [vmem:[%s4 + $0x14] sm:$0xf] %v1399
    %1464 = vst [vmem:[%s4 + $0x18] sm:$0xf] %v1400
    %1465 = vst [vmem:[%s4 + $0x1c] sm:$0xf] %v1401
    %1466 = vst [vmem:[%s4 + $0x20] sm:$0xf] %v1402
    %1467 = vst [vmem:[%s4 + $0x24] sm:$0xf] %v1403
    %1468 = vst [vmem:[%s4 + $0x28] sm:$0xf] %v1404
    %1469 = vst [vmem:[%s4 + $0x2c] sm:$0xf] %v1405
    %1470 = vst [vmem:[%s4 + $0x30] sm:$0xf] %v1406
    %1471 = vst [vmem:[%s4 + $0x34] sm:$0xf] %v1407
    %1472 = vst [vmem:[%s4 + $0x38] sm:$0xf] %v1408
    %1473 = vst [vmem:[%s4 + $0x3c] sm:$0xf] %v1409
    %1474 = vst [vmem:[%s4 + $0x40] sm:$0xf] %v1410
    %1475 = vst [vmem:[%s4 + $0x44] sm:$0xf] %v1411
    %1476 = vst [vmem:[%s4 + $0x48] sm:$0xf] %v1412
    %1477 = vst [vmem:[%s4 + $0x4c] sm:$0xf] %v1413
    %1478 = vst [vmem:[%s4 + $0x50] sm:$0xf] %v1414
    %1479 = vst [vmem:[%s4 + $0x54] sm:$0xf] %v1415
    %1480 = vst [vmem:[%s4 + $0x58] sm:$0xf] %v1416
    %1481 = vst [vmem:[%s4 + $0x5c] sm:$0xf] %v1417
    %1482 = vst [vmem:[%s4 + $0x60] sm:$0xf] %v1418
    %1483 = vst [vmem:[%s4 + $0x64] sm:$0xf] %v1419
    %1484 = vst [vmem:[%s4 + $0x68] sm:$0xf] %v1420
    %1485 = vst [vmem:[%s4 + $0x6c] sm:$0xf] %v1421
    %1486 = vst [vmem:[%s4 + $0x70] sm:$0xf] %v1422
    %1487 = vst [vmem:[%s4 + $0x74] sm:$0xf] %v1423
    %1488 = vst [vmem:[%s4 + $0x78] sm:$0xf] %v1424
    %1489 = vst [vmem:[%s4 + $0x7c] sm:$0xf] %v1425
    %1490 = vst [vmem:[%s4 + $0x80] sm:$0xf] %v1426
    %1491 = vst [vmem:[%s4 + $0x84] sm:$0xf] %v1427
    %1492 = vst [vmem:[%s4 + $0x88] sm:$0xf] %v1428
    %1493 = vst [vmem:[%s4 + $0x8c] sm:$0xf] %v1429
    %1494 = vst [vmem:[%s4 + $0x90] sm:$0xf] %v1430
    %1495 = vst [vmem:[%s4 + $0x94] sm:$0xf] %v1431
    %1496 = vst [vmem:[%s4 + $0x98] sm:$0xf] %v1432
    %1497 = vst [vmem:[%s4 + $0x9c] sm:$0xf] %v1433
    %1498 = vst [vmem:[%s4 + $0xa0] sm:$0xf] %v1434
    %1499 = vst [vmem:[%s4 + $0xa4] sm:$0xf] %v1435
    %1500 = vst [vmem:[%s4 + $0xa8] sm:$0xf] %v1436
    %1501 = vst [vmem:[%s4 + $0xac] sm:$0xf] %v1437
    %1502 = vst [vmem:[%s4 + $0xb0] sm:$0xf] %v1438
    %1503 = vst [vmem:[%s4 + $0xb4] sm:$0xf] %v1439
    %1504 = vst [vmem:[%s4 + $0xb8] sm:$0xf] %v1440
    %1505 = vst [vmem:[%s4 + $0xbc] sm:$0xf] %v1441
    %1506 = vst [vmem:[%s4 + $0xc0] sm:$0xf] %v1442
    %1507 = vst [vmem:[%s4 + $0xc4] sm:$0xf] %v1443
    %1508 = vst [vmem:[%s4 + $0xc8] sm:$0xf] %v1444
    %1509 = vst [vmem:[%s4 + $0xcc] sm:$0xf] %v1445
    %1510 = vst [vmem:[%s4 + $0xd0] sm:$0xf] %v1446
    %1511 = vst [vmem:[%s4 + $0xd4] sm:$0xf] %v1447
    %1512 = vst [vmem:[%s4 + $0xd8] sm:$0xf] %v1448
    %1513 = vst [vmem:[%s4 + $0xdc] sm:$0xf] %v1449
    %1514 = vst [vmem:[%s4 + $0xe0] sm:$0xf] %v1450
    %1515 = vst [vmem:[%s4 + $0xe4] sm:$0xf] %v1451
    %1516 = vst [vmem:[%s4 + $0xe8] sm:$0xf] %v1452
    %1517 = vst [vmem:[%s4 + $0xec] sm:$0xf] %v1453
    %1518 = vst [vmem:[%s4 + $0xf0] sm:$0xf] %v1454
    %1519 = vst [vmem:[%s4 + $0xf4] sm:$0xf] %v1455
    %1520 = vst [vmem:[%s4 + $0xf8] sm:$0xf] %v1456
    %1521 = vst [vmem:[%s4 + $0xfc] sm:$0xf] %v1457
  $region25: #{_matmul_bn.1} parent=0 // pred_fallthru
    _
  // Predicated region
  $region26: #{_matmul_bn.1} parent=0 // pred_check
    _
  $region27: #{_matmul_bn.1} parent=0 // pred_check_branch
    %1523 = sbr.rel (0) target = $region29
  $region28: #{_matmul_bn.1} parent=0 // pred_region
    _
  $region29: #{_matmul_bn.1} parent=0 // pred_fallthru
    _
  // Predicated region
  $region30: #{_matmul_bn.1} parent=0 // pred_check
    _
  $region31: #{_matmul_bn.1} parent=0 // pred_check_branch
    %1525 = sbr.rel (0) target = $region33
  $region32: #{_matmul_bn.1} parent=0 // pred_region
    _
  $region33: #{_matmul_bn.1} parent=0 // pred_fallthru
    _

</llo_original>
